<compile_context>
chip_gen: v5e
topology: v5e:2x2
jax: 0.10.0
libtpu: 0.0.40
codegen_flags: <defaults>
</compile_context>

<pallas_src>
import functools

import jax
import jax.numpy as jnp
import numpy as np
from jax.experimental import pallas as pl
from jax.experimental.pallas import tpu as pltpu


def polyconv_kernel(adj_ref, feat_ref, diag_ref, wt_ref, b_ref, out_ref,
                    abd_ref, fpad_ref, *, theta, n, f_in):
    """One grid step = one block of G graphs.

    adj_ref  : (G, N, N)  0/1 adjacency (bf16 or f32)
    feat_ref : (G, N, F)  f32 node features (unpadded)
    diag_ref : (K, Fp), wt_ref : (Fp, Fp), b_ref : (1, Fp)
    out_ref  : (G*N, Fp)  f32
    abd_ref  : VMEM (G*N, G*N) f32 scratch  (block-diagonal adjacency)
    fpad_ref : VMEM (G*N, Fp)  f32 scratch  (lane-padded features)
    """
    g_per = adj_ref.shape[0]

    # Pack adjacencies block-diagonally + lane-pad features, all in VMEM.
    # Zero every step: with "parallel" semantics each TensorCore owns its own
    # scratch, so a program_id()==0 guard would leave one core uninitialized.
    abd_ref[...] = jnp.zeros_like(abd_ref)
    fpad_ref[...] = jnp.zeros_like(fpad_ref)
    for g in range(g_per):                               # static unroll, G tiny
        abd_ref[g * n:(g + 1) * n, g * n:(g + 1) * n] = (
            adj_ref[g].astype(jnp.float32))              # bf16 0/1 -> f32 exact
        fpad_ref[g * n:(g + 1) * n, :f_in] = feat_ref[g]

    adj = abd_ref[...]                                   # (M, M) f32 block-diag
    feat = fpad_ref[...]                                 # (M, Fp) f32 lane-dense

    # D^{-1/2} from in-degrees (row sums; off-diagonal blocks are zero so the
    # block-diagonal row sum equals the per-graph in-degree), clamp(min=1).
    deg = jnp.sum(adj, axis=-1, keepdims=True)           # (M, 1)   XLU reduce
    d_invsqrt = jax.lax.rsqrt(jnp.maximum(deg, 1.0))     # (M, 1)   EUP rsqrt

    # h = Linear(theta[0] * feat * diag[0]); theta0*diag0 pre-folded into wt.
    # Single stacked (G*N, Fp) @ (Fp, Fp) matmul.
    h = jnp.dot(feat, wt_ref[...],
                preferred_element_type=jnp.float32) + b_ref[...]

    # Polynomial recursion (K tiny -> unroll).  dst-side D^{-1/2} applied to
    # the matmul result instead of materializing adj * d_invsqrt.
    f = feat
    for k in range(1, len(theta)):
        msg = jnp.dot(adj, f * d_invsqrt,
                      preferred_element_type=jnp.float32)        # (M, Fp) MXU
        f = f - (msg * d_invsqrt) * diag_ref[k:k + 1, :]
        h = h + theta[k] * f

    out_ref[...] = h


def prepare_polyconv_params(learnable_diag, weight, bias, theta, *, lane=128):
    """One-time parameter prep (amortized across calls / layers)."""
    theta = tuple(float(t) for t in theta)
    k_ord, f_in = learnable_diag.shape
    fp = pl.cdiv(f_in, lane) * lane
    pad = fp - f_in
    diag_p = jnp.pad(learnable_diag.astype(jnp.float32), ((0, 0), (0, pad)))
    w_t = jnp.pad(weight.astype(jnp.float32).T, ((0, pad), (0, pad)))  # (in, out)
    w_fold = (theta[0] * diag_p[0])[:, None] * w_t        # fold theta0*diag0
    bias_p = jnp.pad(bias.astype(jnp.float32).reshape(1, -1), ((0, 0), (0, pad)))
    return diag_p, w_fold, bias_p


def _pick_graphs_per_block(b_sz, n, target_rows=256):
    """Largest divisor G of B with G*N <= target_rows (fills the 256-wide MXU)."""
    best = 1
    for g in range(1, b_sz + 1):
        if b_sz % g == 0 and g * n <= target_rows:
            best = g
    return best


def polyconv(adj, feat, diag_p, w_fold, bias_p, theta, *, graphs_per_block=None):
    """Fused PolyConv forward.

    adj : (B, N, N) or (N, N) dense 0/1 adjacency (adj[d, s] = 1 for edge s->d).
          bf16 shipping is exact only for unweighted 0/1 graphs.
    feat: (B, N, F) or (N, F) float32 node features (unpadded).
    diag_p / w_fold / bias_p: outputs of prepare_polyconv_params().
    Returns the lane-padded output (B, N, Fp); padded lanes are exactly zero, so
    consumers can slice [..., :F] lazily (or fuse it away).
    """
    squeeze = False
    if adj.ndim == 2:
        adj, feat, squeeze = adj[None], feat[None], True

    theta = tuple(float(t) for t in theta)
    b_sz, n, f_in = feat.shape
    k_ord, fp = diag_p.shape
    assert k_ord >= len(theta)

    # --- choose graphs-per-block / grid length ---
    if graphs_per_block is None:
        g_per = _pick_graphs_per_block(b_sz, n)
        try:
            kind = jax.devices()[0].device_kind.lower()
        except Exception:  # pragma: no cover
            kind = ""
        # v7x has 2 TensorCores: keep >= 2 grid blocks so "parallel" can shard.
        if ("v7" in kind or "7x" in kind) and g_per == b_sz and b_sz % 2 == 0 and b_sz >= 2:
            g_per = b_sz // 2
    else:
        g_per = int(graphs_per_block)
    assert b_sz % g_per == 0, "graphs_per_block must divide the batch size"
    nb = b_sz // g_per
    m = g_per * n

    # Free leading-dim splits (metadata-only reshapes; no HBM pass).
    adj4d = adj.reshape(nb, g_per, n, n)
    feat4d = feat.reshape(nb, g_per, n, f_in)

    # --- VMEM budget (real need + headroom, capped well below v7x's 64 MiB) ---
    adj_blk = g_per * n * n * adj.dtype.itemsize
    feat_blk = g_per * n * f_in * 4
    out_blk = m * fp * 4
    param_b = (k_ord * fp + fp * fp + fp) * 4
    scratch_b = (m * m + m * fp) * 4
    temps_b = 6 * m * fp * 4 + 2 * m * 4
    need = 2 * (adj_blk + feat_blk + out_blk + param_b) + scratch_b + temps_b
    vmem_limit = int(min(max(4 * need, 8 << 20), 48 << 20))

    cost = pl.CostEstimate(
        flops=nb * (2 * m * fp * fp
                    + (len(theta) - 1) * (2 * m * m * fp + 5 * m * fp)
                    + m * m),
        transcendentals=nb * m,
        bytes_accessed=nb * (adj_blk + feat_blk + out_blk) + param_b,
    )

    kernel = functools.partial(polyconv_kernel, theta=theta, n=n, f_in=f_in)
    out = pl.pallas_call(
        kernel,
        out_shape=jax.ShapeDtypeStruct((nb, m, fp), jnp.float32),
        grid=(nb,),
        in_specs=[
            pl.BlockSpec((None, g_per, n, n), lambda b: (b, 0, 0, 0)),     # adj
            pl.BlockSpec((None, g_per, n, f_in), lambda b: (b, 0, 0, 0)),  # feat
            pl.BlockSpec((k_ord, fp), lambda b: (0, 0)),                   # diag
            pl.BlockSpec((fp, fp), lambda b: (0, 0)),                      # folded W
            pl.BlockSpec((1, fp), lambda b: (0, 0)),                       # bias
        ],
        out_specs=pl.BlockSpec((None, m, fp), lambda b: (b, 0, 0)),
        scratch_shapes=[
            pltpu.VMEM((m, m), jnp.float32),    # block-diagonal adjacency
            pltpu.VMEM((m, fp), jnp.float32),   # lane-padded features
        ],
        compiler_params=pltpu.CompilerParams(
            dimension_semantics=("parallel",),
            vmem_limit_bytes=vmem_limit),
        cost_estimate=cost,
    )(adj4d, feat4d, diag_p, w_fold, bias_p)

    out = out.reshape(b_sz, n, fp)     # free: (NB, G*N, Fp) is already (B, N, Fp)
    return out[0] if squeeze else out


def polyconv_ref(adj, feat, learnable_diag, weight, bias, theta):
    """Pure-JAX reference mirroring the PyTorch forward (batched over dim 0)."""
    hi = jax.lax.Precision.HIGHEST
    deg = jnp.maximum(adj.sum(axis=-1, keepdims=True), 1.0)
    d_invsqrt = deg ** -0.5
    h = (theta[0] * feat) * learnable_diag[0]
    h = jnp.matmul(h, weight.T, precision=hi) + bias
    f = feat
    for k in range(1, len(theta)):
        agg = jnp.matmul(adj, f * d_invsqrt, precision=hi)
        f = f - (agg * d_invsqrt) * learnable_diag[k]
        h = h + theta[k] * f
    return h


if __name__ == "__main__":
    B = 4           # graphs per call
    N = 64          # nodes per graph
    F = 32          # in_feats == out_feats (Linear(out, out) applied to feat)
    theta = (0.5, 0.3, 0.2)   # K = 3 matches learnable_diag shape (3, in_feats)

    key = jax.random.PRNGKey(0)
    k_adj, k_feat, k_diag, k_w = jax.random.split(key, 4)

    # Deterministic unweighted dense adjacency (adj[b, dst, src]); bf16 0/1 exact.
    adj = (jax.random.uniform(k_adj, (B, N, N)) < 0.15).astype(jnp.bfloat16)
    feat = jax.random.normal(k_feat, (B, N, F), dtype=jnp.float32)

    # Parameters (as in __init__ / reset_parameters):
    learnable_diag = jax.random.uniform(k_diag, (3, F), dtype=jnp.float32)
    bound = float(np.sqrt(6.0 / (F + F)))
    weight = jax.random.uniform(k_w, (F, F), minval=-bound, maxval=bound,
                                dtype=jnp.float32)
    bias = jnp.zeros((F,), dtype=jnp.float32)

    # One-time parameter prep (amortized across calls / layers).
    diag_p, w_fold, bias_p = prepare_polyconv_params(learnable_diag, weight, bias, theta)

    out = polyconv(adj, feat, diag_p, w_fold, bias_p, theta)
    out = jax.block_until_ready(out)

    ref = polyconv_ref(adj.astype(jnp.float32), feat, learnable_diag, weight, bias, theta)
    np.testing.assert_allclose(np.asarray(out[..., :F]), np.asarray(ref),
                               rtol=1e-4, atol=1e-4)
    np.testing.assert_allclose(np.asarray(out[..., F:]), 0.0, atol=1e-6)

    print("KERNEL_OK")
</pallas_src>

<mosaic_0001>
module attributes {stable_mosaic.version = 11 : i64} {
  func.func @polyconv_kernel(%arg0: i32, %arg1: memref<1x4x64x64xbf16, #tpu.memory_space<vmem>>, %arg2: memref<1x4x64x32xf32, #tpu.memory_space<vmem>>, %arg3: memref<3x128xf32, #tpu.memory_space<vmem>>, %arg4: memref<128x128xf32, #tpu.memory_space<vmem>>, %arg5: memref<1x128xf32, #tpu.memory_space<vmem>>, %arg6: memref<1x256x128xf32, #tpu.memory_space<vmem>>, %arg7: memref<256x256xf32, #tpu.memory_space<vmem>>, %arg8: memref<256x128xf32, #tpu.memory_space<vmem>>) attributes {dimension_semantics = [#tpu.dimension_semantics<parallel>], iteration_bounds = array<i64: 1>, scalar_prefetch = 0 : i64, scratch_operands = 2 : i64, tpu.core_type = #tpu.core_type<tc>, window_params = [{transform_indices = @transform_0, window_bounds = array<i64: 1, 4, 64, 64>}, {transform_indices = @transform_1, window_bounds = array<i64: 1, 4, 64, 32>}, {pipeline_mode = #tpu.pipeline_mode<synchronous>, transform_indices = @transform_2, window_bounds = array<i64: 3, 128>}, {pipeline_mode = #tpu.pipeline_mode<synchronous>, transform_indices = @transform_3, window_bounds = array<i64: 128, 128>}, {pipeline_mode = #tpu.pipeline_mode<synchronous>, transform_indices = @transform_4, window_bounds = array<i64: 1, 128>}, {transform_indices = @transform_5, window_bounds = array<i64: 1, 256, 128>}]} {
    %cst = arith.constant 0.000000e+00 : f32
    %0 = vector.broadcast %cst : f32 to vector<256x256xf32>
    %c0 = arith.constant 0 : index
    %c0_0 = arith.constant 0 : index
    %1 = vector.load %arg7[%c0, %c0_0] : memref<256x256xf32, #tpu.memory_space<vmem>>, vector<256x256xf32>
    tpu.vector_store %arg7[%c0, %c0_0], %0 {strides = array<i32>} : memref<256x256xf32, #tpu.memory_space<vmem>>, vector<256x256xf32>,
    %cst_1 = arith.constant 0.000000e+00 : f32
    %2 = vector.broadcast %cst_1 : f32 to vector<256x128xf32>
    %c0_2 = arith.constant 0 : index
    %c0_3 = arith.constant 0 : index
    %3 = vector.load %arg8[%c0_2, %c0_3] : memref<256x128xf32, #tpu.memory_space<vmem>>, vector<256x128xf32>
    tpu.vector_store %arg8[%c0_2, %c0_3], %2 {strides = array<i32>} : memref<256x128xf32, #tpu.memory_space<vmem>>, vector<256x128xf32>,
    %c0_4 = arith.constant 0 : index
    %c0_5 = arith.constant 0 : index
    %c0_6 = arith.constant 0 : index
    %c0_7 = arith.constant 0 : index
    %4 = vector.load %arg1[%c0_4, %c0_5, %c0_6, %c0_7] : memref<1x4x64x64xbf16, #tpu.memory_space<vmem>>, vector<1x1x64x64xbf16>
    %5 = vector.shape_cast %4 : vector<1x1x64x64xbf16> to vector<64x64xbf16>
    %6 = arith.extf %5 : vector<64x64xbf16> to vector<64x64xf32>
    %c0_8 = arith.constant 0 : index
    %c0_9 = arith.constant 0 : index
    %7 = vector.load %arg7[%c0_8, %c0_9] : memref<256x256xf32, #tpu.memory_space<vmem>>, vector<64x64xf32>
    tpu.vector_store %arg7[%c0_8, %c0_9], %6 {strides = array<i32>} : memref<256x256xf32, #tpu.memory_space<vmem>>, vector<64x64xf32>,
    %c0_10 = arith.constant 0 : index
    %c0_11 = arith.constant 0 : index
    %c0_12 = arith.constant 0 : index
    %c0_13 = arith.constant 0 : index
    %8 = vector.load %arg2[%c0_10, %c0_11, %c0_12, %c0_13] : memref<1x4x64x32xf32, #tpu.memory_space<vmem>>, vector<1x1x64x32xf32>
    %9 = vector.shape_cast %8 : vector<1x1x64x32xf32> to vector<64x32xf32>
    %c0_14 = arith.constant 0 : index
    %c0_15 = arith.constant 0 : index
    %10 = vector.load %arg8[%c0_14, %c0_15] : memref<256x128xf32, #tpu.memory_space<vmem>>, vector<64x32xf32>
    tpu.vector_store %arg8[%c0_14, %c0_15], %9 {strides = array<i32>} : memref<256x128xf32, #tpu.memory_space<vmem>>, vector<64x32xf32>,
    %c0_16 = arith.constant 0 : index
    %c1 = arith.constant 1 : index
    %c0_17 = arith.constant 0 : index
    %c0_18 = arith.constant 0 : index
    %11 = vector.load %arg1[%c0_16, %c1, %c0_17, %c0_18] : memref<1x4x64x64xbf16, #tpu.memory_space<vmem>>, vector<1x1x64x64xbf16>
    %12 = vector.shape_cast %11 : vector<1x1x64x64xbf16> to vector<64x64xbf16>
    %13 = arith.extf %12 : vector<64x64xbf16> to vector<64x64xf32>
    %c64 = arith.constant 64 : index
    %c64_19 = arith.constant 64 : index
    %14 = vector.load %arg7[%c64, %c64_19] : memref<256x256xf32, #tpu.memory_space<vmem>>, vector<64x64xf32>
    tpu.vector_store %arg7[%c64, %c64_19], %13 {strides = array<i32>} : memref<256x256xf32, #tpu.memory_space<vmem>>, vector<64x64xf32>,
    %c0_20 = arith.constant 0 : index
    %c1_21 = arith.constant 1 : index
    %c0_22 = arith.constant 0 : index
    %c0_23 = arith.constant 0 : index
    %15 = vector.load %arg2[%c0_20, %c1_21, %c0_22, %c0_23] : memref<1x4x64x32xf32, #tpu.memory_space<vmem>>, vector<1x1x64x32xf32>
    %16 = vector.shape_cast %15 : vector<1x1x64x32xf32> to vector<64x32xf32>
    %c64_24 = arith.constant 64 : index
    %c0_25 = arith.constant 0 : index
    %17 = vector.load %arg8[%c64_24, %c0_25] : memref<256x128xf32, #tpu.memory_space<vmem>>, vector<64x32xf32>
    tpu.vector_store %arg8[%c64_24, %c0_25], %16 {strides = array<i32>} : memref<256x128xf32, #tpu.memory_space<vmem>>, vector<64x32xf32>,
    %c0_26 = arith.constant 0 : index
    %c2 = arith.constant 2 : index
    %c0_27 = arith.constant 0 : index
    %c0_28 = arith.constant 0 : index
    %18 = vector.load %arg1[%c0_26, %c2, %c0_27, %c0_28] : memref<1x4x64x64xbf16, #tpu.memory_space<vmem>>, vector<1x1x64x64xbf16>
    %19 = vector.shape_cast %18 : vector<1x1x64x64xbf16> to vector<64x64xbf16>
    %20 = arith.extf %19 : vector<64x64xbf16> to vector<64x64xf32>
    %c128 = arith.constant 128 : index
    %c128_29 = arith.constant 128 : index
    %21 = vector.load %arg7[%c128, %c128_29] : memref<256x256xf32, #tpu.memory_space<vmem>>, vector<64x64xf32>
    tpu.vector_store %arg7[%c128, %c128_29], %20 {strides = array<i32>} : memref<256x256xf32, #tpu.memory_space<vmem>>, vector<64x64xf32>,
    %c0_30 = arith.constant 0 : index
    %c2_31 = arith.constant 2 : index
    %c0_32 = arith.constant 0 : index
    %c0_33 = arith.constant 0 : index
    %22 = vector.load %arg2[%c0_30, %c2_31, %c0_32, %c0_33] : memref<1x4x64x32xf32, #tpu.memory_space<vmem>>, vector<1x1x64x32xf32>
    %23 = vector.shape_cast %22 : vector<1x1x64x32xf32> to vector<64x32xf32>
    %c128_34 = arith.constant 128 : index
    %c0_35 = arith.constant 0 : index
    %24 = vector.load %arg8[%c128_34, %c0_35] : memref<256x128xf32, #tpu.memory_space<vmem>>, vector<64x32xf32>
    tpu.vector_store %arg8[%c128_34, %c0_35], %23 {strides = array<i32>} : memref<256x128xf32, #tpu.memory_space<vmem>>, vector<64x32xf32>,
    %c0_36 = arith.constant 0 : index
    %c3 = arith.constant 3 : index
    %c0_37 = arith.constant 0 : index
    %c0_38 = arith.constant 0 : index
    %25 = vector.load %arg1[%c0_36, %c3, %c0_37, %c0_38] : memref<1x4x64x64xbf16, #tpu.memory_space<vmem>>, vector<1x1x64x64xbf16>
    %26 = vector.shape_cast %25 : vector<1x1x64x64xbf16> to vector<64x64xbf16>
    %27 = arith.extf %26 : vector<64x64xbf16> to vector<64x64xf32>
    %c192 = arith.constant 192 : index
    %c192_39 = arith.constant 192 : index
    %28 = vector.load %arg7[%c192, %c192_39] : memref<256x256xf32, #tpu.memory_space<vmem>>, vector<64x64xf32>
    tpu.vector_store %arg7[%c192, %c192_39], %27 {strides = array<i32>} : memref<256x256xf32, #tpu.memory_space<vmem>>, vector<64x64xf32>,
    %c0_40 = arith.constant 0 : index
    %c3_41 = arith.constant 3 : index
    %c0_42 = arith.constant 0 : index
    %c0_43 = arith.constant 0 : index
    %29 = vector.load %arg2[%c0_40, %c3_41, %c0_42, %c0_43] : memref<1x4x64x32xf32, #tpu.memory_space<vmem>>, vector<1x1x64x32xf32>
    %30 = vector.shape_cast %29 : vector<1x1x64x32xf32> to vector<64x32xf32>
    %c192_44 = arith.constant 192 : index
    %c0_45 = arith.constant 0 : index
    %31 = vector.load %arg8[%c192_44, %c0_45] : memref<256x128xf32, #tpu.memory_space<vmem>>, vector<64x32xf32>
    tpu.vector_store %arg8[%c192_44, %c0_45], %30 {strides = array<i32>} : memref<256x128xf32, #tpu.memory_space<vmem>>, vector<64x32xf32>,
    %c0_46 = arith.constant 0 : index
    %c0_47 = arith.constant 0 : index
    %32 = vector.load %arg7[%c0_46, %c0_47] : memref<256x256xf32, #tpu.memory_space<vmem>>, vector<256x256xf32>
    %c0_48 = arith.constant 0 : index
    %c0_49 = arith.constant 0 : index
    %33 = vector.load %arg8[%c0_48, %c0_49] : memref<256x128xf32, #tpu.memory_space<vmem>>, vector<256x128xf32>
    %cst_50 = arith.constant dense<0.000000e+00> : vector<256xf32>
    %34 = vector.multi_reduction <add>, %32, %cst_50 [1] : vector<256x256xf32> to vector<256xf32>
    %35 = vector.shape_cast %34 : vector<256xf32> to vector<256x1xf32>
    %cst_51 = arith.constant 1.000000e+00 : f32
    %36 = vector.broadcast %cst_51 : f32 to vector<256x1xf32>
    %37 = arith.maximumf %35, %36 : vector<256x1xf32>
    %38 = math.rsqrt %37 : vector<256x1xf32>
    %c0_52 = arith.constant 0 : index
    %c0_53 = arith.constant 0 : index
    %39 = vector.load %arg4[%c0_52, %c0_53] : memref<128x128xf32, #tpu.memory_space<vmem>>, vector<128x128xf32>
    %cst_54 = arith.constant dense<0.000000e+00> : vector<256x128xf32>
    %40 = tpu.matmul %33, %39, %cst_54 {dimension_numbers = #tpu.dot_dimension_numbers<[1], [0], [0], [1], [0, 0, 1, 1], [], []>} : vector<256x128xf32>, vector<128x128xf32>, vector<256x128xf32> -> vector<256x128xf32>
    %c0_55 = arith.constant 0 : index
    %c0_56 = arith.constant 0 : index
    %41 = vector.load %arg5[%c0_55, %c0_56] : memref<1x128xf32, #tpu.memory_space<vmem>>, vector<1x128xf32>
    %42 = vector.broadcast %41 : vector<1x128xf32> to vector<256x128xf32>
    %43 = arith.addf %40, %42 : vector<256x128xf32>
    %44 = vector.broadcast %38 : vector<256x1xf32> to vector<256x128xf32>
    %45 = arith.mulf %33, %44 : vector<256x128xf32>
    %cst_57 = arith.constant dense<0.000000e+00> : vector<256x128xf32>
    %46 = tpu.matmul %32, %45, %cst_57 {dimension_numbers = #tpu.dot_dimension_numbers<[1], [0], [0], [1], [0, 0, 1, 1], [], []>} : vector<256x256xf32>, vector<256x128xf32>, vector<256x128xf32> -> vector<256x128xf32>
    %47 = vector.broadcast %38 : vector<256x1xf32> to vector<256x128xf32>
    %48 = arith.mulf %46, %47 : vector<256x128xf32>
    %c1_58 = arith.constant 1 : index
    %c0_59 = arith.constant 0 : index
    %49 = vector.load %arg3[%c1_58, %c0_59] : memref<3x128xf32, #tpu.memory_space<vmem>>, vector<1x128xf32>
    %50 = vector.broadcast %49 : vector<1x128xf32> to vector<256x128xf32>
    %51 = arith.mulf %48, %50 : vector<256x128xf32>
    %52 = arith.subf %33, %51 : vector<256x128xf32>
    %cst_60 = arith.constant 3.000000e-01 : f32
    %53 = vector.broadcast %cst_60 : f32 to vector<256x128xf32>
    %54 = arith.mulf %53, %52 : vector<256x128xf32>
    %55 = arith.addf %43, %54 : vector<256x128xf32>
    %56 = vector.broadcast %38 : vector<256x1xf32> to vector<256x128xf32>
    %57 = arith.mulf %52, %56 : vector<256x128xf32>
    %cst_61 = arith.constant dense<0.000000e+00> : vector<256x128xf32>
    %58 = tpu.matmul %32, %57, %cst_61 {dimension_numbers = #tpu.dot_dimension_numbers<[1], [0], [0], [1], [0, 0, 1, 1], [], []>} : vector<256x256xf32>, vector<256x128xf32>, vector<256x128xf32> -> vector<256x128xf32>
    %59 = vector.broadcast %38 : vector<256x1xf32> to vector<256x128xf32>
    %60 = arith.mulf %58, %59 : vector<256x128xf32>
    %c2_62 = arith.constant 2 : index
    %c0_63 = arith.constant 0 : index
    %61 = vector.load %arg3[%c2_62, %c0_63] : memref<3x128xf32, #tpu.memory_space<vmem>>, vector<1x128xf32>
    %62 = vector.broadcast %61 : vector<1x128xf32> to vector<256x128xf32>
    %63 = arith.mulf %60, %62 : vector<256x128xf32>
    %64 = arith.subf %52, %63 : vector<256x128xf32>
    %cst_64 = arith.constant 2.000000e-01 : f32
    %65 = vector.broadcast %cst_64 : f32 to vector<256x128xf32>
    %66 = arith.mulf %65, %64 : vector<256x128xf32>
    %67 = arith.addf %55, %66 : vector<256x128xf32>
    %c0_65 = arith.constant 0 : index
    %c0_66 = arith.constant 0 : index
    %c0_67 = arith.constant 0 : index
    %68 = vector.load %arg6[%c0_65, %c0_66, %c0_67] : memref<1x256x128xf32, #tpu.memory_space<vmem>>, vector<1x256x128xf32>
    %69 = vector.shape_cast %68 : vector<1x256x128xf32> to vector<256x128xf32>
    %70 = vector.shape_cast %67 : vector<256x128xf32> to vector<1x256x128xf32>
    tpu.vector_store %arg6[%c0_65, %c0_66, %c0_67], %70 {strides = array<i32>} : memref<1x256x128xf32, #tpu.memory_space<vmem>>, vector<1x256x128xf32>,
    return
  }
  func.func @transform_0(%arg0: i32) -> (i32, i32, i32, i32) {
    %c0_i32 = arith.constant 0 : i32
    %c0_i32_0 = arith.constant 0 : i32
    %c0_i32_1 = arith.constant 0 : i32
    %c0_i32_2 = arith.constant 0 : i32
    return %arg0, %c0_i32, %c0_i32_0, %c0_i32_1 : i32, i32, i32, i32
  }
  func.func @transform_1(%arg0: i32) -> (i32, i32, i32, i32) {
    %c0_i32 = arith.constant 0 : i32
    %c0_i32_0 = arith.constant 0 : i32
    %c0_i32_1 = arith.constant 0 : i32
    %c0_i32_2 = arith.constant 0 : i32
    return %arg0, %c0_i32, %c0_i32_0, %c0_i32_1 : i32, i32, i32, i32
  }
  func.func @transform_2(%arg0: i32) -> (i32, i32) {
    %c0_i32 = arith.constant 0 : i32
    %c0_i32_0 = arith.constant 0 : i32
    %c0_i32_1 = arith.constant 0 : i32
    return %c0_i32, %c0_i32_0 : i32, i32
  }
  func.func @transform_3(%arg0: i32) -> (i32, i32) {
    %c0_i32 = arith.constant 0 : i32
    %c0_i32_0 = arith.constant 0 : i32
    %c0_i32_1 = arith.constant 0 : i32
    return %c0_i32, %c0_i32_0 : i32, i32
  }
  func.func @transform_4(%arg0: i32) -> (i32, i32) {
    %c0_i32 = arith.constant 0 : i32
    %c0_i32_0 = arith.constant 0 : i32
    %c0_i32_1 = arith.constant 0 : i32
    return %c0_i32, %c0_i32_0 : i32, i32
  }
  func.func @transform_5(%arg0: i32) -> (i32, i32, i32) {
    %c0_i32 = arith.constant 0 : i32
    %c0_i32_0 = arith.constant 0 : i32
    %c0_i32_1 = arith.constant 0 : i32
    return %arg0, %c0_i32, %c0_i32_0 : i32, i32, i32
  }
}

</mosaic_0001>

<llo_original>
// kernel: tpu_custom_call.1
$region0: #{tpu_custom_call.1}
  #allocation0 [shape = 'u32[]', space=smem, size = 0x4, offset = 0x4, fixed_abs, tag = 'smem constant byte address 0x4 - core index']
  #allocation1 [shape = 'u32[72,128]{1,0:T(1,128)}', space=vmem, size = 0x9000, scoped, tag = 'internal scratch']
  #allocation2 [shape = 'f32[256,256]{1,0:T(8,128)}', space=vmem, size = 0x40000, scoped, tag = 'scratch operand']
  #allocation3 [shape = 'f32[256,128]{1,0:T(8,128)}', space=vmem, size = 0x20000, scoped, tag = 'scratch operand']
  %s0 = inlined_call_operand.vmem [shape: bf16[1,4,64,64], index: 0, kind: input, shape index: {}]
  %s1 = inlined_call_operand.vmem [shape: f32[1,4,64,32], index: 1, kind: input, shape index: {}]
  %s2 = inlined_call_operand.vmem [shape: f32[3,128], index: 2, kind: input, shape index: {}]
  %s3 = inlined_call_operand.vmem [shape: f32[128,128], index: 3, kind: input, shape index: {}]
  %s4 = inlined_call_operand.vmem [shape: f32[1,128], index: 4, kind: input, shape index: {}]
  %s5 = inlined_call_operand.hbm [shape: f32[1,256,128], index: 5, kind: output, shape index: {}]
  %s6 = sld [smem:[#allocation0]]
  $region30: #{tpu_custom_call.1} parent=0
    _
  %s8 = ssub.s32 1, %s6
  %s9 = scalar_select 0, %s8, %s6
  $region1: #{tpu_custom_call.1} parent=0
    #allocation4 [shape = 'u8[131072]{0}', space=vmem, size = 0x20000, scoped, tag = 'output window, operand 0, single buffered']
    #allocation5 [shape = 's32[1]{0}', space=sflag, size = 0x4, scoped, tag = 'scoped memory for tpu_custom_call.1']
    %10 = vsyncpa [#allocation5], 0
    // Predicated region
    $region2: #{tpu_custom_call.1} parent=1 // pred_check
      _
    $region3: #{tpu_custom_call.1} parent=1 // pred_check_branch
      %12 = sbr.rel (0) target = $region5
    $region4: #{tpu_custom_call.1} parent=1 // pred_region
      _
    $region5: #{tpu_custom_call.1} parent=1 // pred_fallthru
      _
    // Predicated region
    $region6: #{tpu_custom_call.1} parent=1 // pred_check
      _
    $region7: #{tpu_custom_call.1} parent=1 // pred_check_branch
      %14 = sbr.rel (0) target = $region9
    $region8: #{tpu_custom_call.1} parent=1 // pred_region
      _
    $region9: #{tpu_custom_call.1} parent=1 // pred_fallthru
      _
    // Predicated region
    $region10: #{tpu_custom_call.1} parent=1 // pred_check
      _
    $region11: #{tpu_custom_call.1} parent=1 // pred_check_branch
      %16 = sbr.rel (0) target = $region13
    $region12: #{tpu_custom_call.1} parent=1 // pred_region
      _
    $region13: #{tpu_custom_call.1} parent=1 // pred_fallthru
      _
    // Predicated region
    $region14: #{tpu_custom_call.1} parent=1 // pred_check
      _
    $region15: #{tpu_custom_call.1} parent=1 // pred_check_branch
      %18 = sbr.rel (0) target = $region17
    $region16: #{tpu_custom_call.1} parent=1 // pred_region
      _
    $region17: #{tpu_custom_call.1} parent=1 // pred_fallthru
      _
    // Predicated region
    $region18: #{tpu_custom_call.1} parent=1 // pred_check
      _
    $region19: #{tpu_custom_call.1} parent=1 // pred_check_branch
      %20 = sbr.rel (0) target = $region21
    $region20: #{tpu_custom_call.1} parent=1 // pred_region
      _
    $region21: #{tpu_custom_call.1} parent=1 // pred_fallthru
      _
    %21 = vst [vmem:[#allocation2] sm:$0xff] 0.0
    %22 = vst [vmem:[#allocation2 + $0x8] sm:$0xff] 0.0
    %23 = vst [vmem:[#allocation2 + $0x10] sm:$0xff] 0.0
    %24 = vst [vmem:[#allocation2 + $0x18] sm:$0xff] 0.0
    %25 = vst [vmem:[#allocation2 + $0x20] sm:$0xff] 0.0
    %26 = vst [vmem:[#allocation2 + $0x28] sm:$0xff] 0.0
    %27 = vst [vmem:[#allocation2 + $0x30] sm:$0xff] 0.0
    %28 = vst [vmem:[#allocation2 + $0x38] sm:$0xff] 0.0
    %29 = vst [vmem:[#allocation2 + $0x40] sm:$0xff] 0.0
    %30 = vst [vmem:[#allocation2 + $0x48] sm:$0xff] 0.0
    %31 = vst [vmem:[#allocation2 + $0x50] sm:$0xff] 0.0
    %32 = vst [vmem:[#allocation2 + $0x58] sm:$0xff] 0.0
    %33 = vst [vmem:[#allocation2 + $0x60] sm:$0xff] 0.0
    %34 = vst [vmem:[#allocation2 + $0x68] sm:$0xff] 0.0
    %35 = vst [vmem:[#allocation2 + $0x70] sm:$0xff] 0.0
    %36 = vst [vmem:[#allocation2 + $0x78] sm:$0xff] 0.0
    %37 = vst [vmem:[#allocation2 + $0x80] sm:$0xff] 0.0
    %38 = vst [vmem:[#allocation2 + $0x88] sm:$0xff] 0.0
    %39 = vst [vmem:[#allocation2 + $0x90] sm:$0xff] 0.0
    %40 = vst [vmem:[#allocation2 + $0x98] sm:$0xff] 0.0
    %41 = vst [vmem:[#allocation2 + $0xa0] sm:$0xff] 0.0
    %42 = vst [vmem:[#allocation2 + $0xa8] sm:$0xff] 0.0
    %43 = vst [vmem:[#allocation2 + $0xb0] sm:$0xff] 0.0
    %44 = vst [vmem:[#allocation2 + $0xb8] sm:$0xff] 0.0
    %45 = vst [vmem:[#allocation2 + $0xc0] sm:$0xff] 0.0
    %46 = vst [vmem:[#allocation2 + $0xc8] sm:$0xff] 0.0
    %47 = vst [vmem:[#allocation2 + $0xd0] sm:$0xff] 0.0
    %48 = vst [vmem:[#allocation2 + $0xd8] sm:$0xff] 0.0
    %49 = vst [vmem:[#allocation2 + $0xe0] sm:$0xff] 0.0
    %50 = vst [vmem:[#allocation2 + $0xe8] sm:$0xff] 0.0
    %51 = vst [vmem:[#allocation2 + $0xf0] sm:$0xff] 0.0
    %52 = vst [vmem:[#allocation2 + $0xf8] sm:$0xff] 0.0
    %53 = vst [vmem:[#allocation2 + $0x100] sm:$0xff] 0.0
    %54 = vst [vmem:[#allocation2 + $0x108] sm:$0xff] 0.0
    %55 = vst [vmem:[#allocation2 + $0x110] sm:$0xff] 0.0
    %56 = vst [vmem:[#allocation2 + $0x118] sm:$0xff] 0.0
    %57 = vst [vmem:[#allocation2 + $0x120] sm:$0xff] 0.0
    %58 = vst [vmem:[#allocation2 + $0x128] sm:$0xff] 0.0
    %59 = vst [vmem:[#allocation2 + $0x130] sm:$0xff] 0.0
    %60 = vst [vmem:[#allocation2 + $0x138] sm:$0xff] 0.0
    %61 = vst [vmem:[#allocation2 + $0x140] sm:$0xff] 0.0
    %62 = vst [vmem:[#allocation2 + $0x148] sm:$0xff] 0.0
    %63 = vst [vmem:[#allocation2 + $0x150] sm:$0xff] 0.0
    %64 = vst [vmem:[#allocation2 + $0x158] sm:$0xff] 0.0
    %65 = vst [vmem:[#allocation2 + $0x160] sm:$0xff] 0.0
    %66 = vst [vmem:[#allocation2 + $0x168] sm:$0xff] 0.0
    %67 = vst [vmem:[#allocation2 + $0x170] sm:$0xff] 0.0
    %68 = vst [vmem:[#allocation2 + $0x178] sm:$0xff] 0.0
    %69 = vst [vmem:[#allocation2 + $0x180] sm:$0xff] 0.0
    %70 = vst [vmem:[#allocation2 + $0x188] sm:$0xff] 0.0
    %71 = vst [vmem:[#allocation2 + $0x190] sm:$0xff] 0.0
    %72 = vst [vmem:[#allocation2 + $0x198] sm:$0xff] 0.0
    %73 = vst [vmem:[#allocation2 + $0x1a0] sm:$0xff] 0.0
    %74 = vst [vmem:[#allocation2 + $0x1a8] sm:$0xff] 0.0
    %75 = vst [vmem:[#allocation2 + $0x1b0] sm:$0xff] 0.0
    %76 = vst [vmem:[#allocation2 + $0x1b8] sm:$0xff] 0.0
    %77 = vst [vmem:[#allocation2 + $0x1c0] sm:$0xff] 0.0
    %78 = vst [vmem:[#allocation2 + $0x1c8] sm:$0xff] 0.0
    %79 = vst [vmem:[#allocation2 + $0x1d0] sm:$0xff] 0.0
    %80 = vst [vmem:[#allocation2 + $0x1d8] sm:$0xff] 0.0
    %81 = vst [vmem:[#allocation2 + $0x1e0] sm:$0xff] 0.0
    %82 = vst [vmem:[#allocation2 + $0x1e8] sm:$0xff] 0.0
    %83 = vst [vmem:[#allocation2 + $0x1f0] sm:$0xff] 0.0
    %84 = vst [vmem:[#allocation2 + $0x1f8] sm:$0xff] 0.0
    %85 = vst [vmem:[#allocation3] sm:$0xff] 0.0
    %86 = vst [vmem:[#allocation3 + $0x8] sm:$0xff] 0.0
    %87 = vst [vmem:[#allocation3 + $0x10] sm:$0xff] 0.0
    %88 = vst [vmem:[#allocation3 + $0x18] sm:$0xff] 0.0
    %89 = vst [vmem:[#allocation3 + $0x20] sm:$0xff] 0.0
    %90 = vst [vmem:[#allocation3 + $0x28] sm:$0xff] 0.0
    %91 = vst [vmem:[#allocation3 + $0x30] sm:$0xff] 0.0
    %92 = vst [vmem:[#allocation3 + $0x38] sm:$0xff] 0.0
    %93 = vst [vmem:[#allocation3 + $0x40] sm:$0xff] 0.0
    %94 = vst [vmem:[#allocation3 + $0x48] sm:$0xff] 0.0
    %95 = vst [vmem:[#allocation3 + $0x50] sm:$0xff] 0.0
    %96 = vst [vmem:[#allocation3 + $0x58] sm:$0xff] 0.0
    %97 = vst [vmem:[#allocation3 + $0x60] sm:$0xff] 0.0
    %98 = vst [vmem:[#allocation3 + $0x68] sm:$0xff] 0.0
    %99 = vst [vmem:[#allocation3 + $0x70] sm:$0xff] 0.0
    %100 = vst [vmem:[#allocation3 + $0x78] sm:$0xff] 0.0
    %101 = vst [vmem:[#allocation3 + $0x80] sm:$0xff] 0.0
    %102 = vst [vmem:[#allocation3 + $0x88] sm:$0xff] 0.0
    %103 = vst [vmem:[#allocation3 + $0x90] sm:$0xff] 0.0
    %104 = vst [vmem:[#allocation3 + $0x98] sm:$0xff] 0.0
    %105 = vst [vmem:[#allocation3 + $0xa0] sm:$0xff] 0.0
    %106 = vst [vmem:[#allocation3 + $0xa8] sm:$0xff] 0.0
    %107 = vst [vmem:[#allocation3 + $0xb0] sm:$0xff] 0.0
    %108 = vst [vmem:[#allocation3 + $0xb8] sm:$0xff] 0.0
    %109 = vst [vmem:[#allocation3 + $0xc0] sm:$0xff] 0.0
    %110 = vst [vmem:[#allocation3 + $0xc8] sm:$0xff] 0.0
    %111 = vst [vmem:[#allocation3 + $0xd0] sm:$0xff] 0.0
    %112 = vst [vmem:[#allocation3 + $0xd8] sm:$0xff] 0.0
    %113 = vst [vmem:[#allocation3 + $0xe0] sm:$0xff] 0.0
    %114 = vst [vmem:[#allocation3 + $0xe8] sm:$0xff] 0.0
    %115 = vst [vmem:[#allocation3 + $0xf0] sm:$0xff] 0.0
    %116 = vst [vmem:[#allocation3 + $0xf8] sm:$0xff] 0.0
    %v117 = vld [vmem:[%s0] sm:$0xf]
    %v118 = vld [vmem:[%s0 + $0x4] sm:$0xf]
    %v119 = vld [vmem:[%s0 + $0x8] sm:$0xf]
    %v120 = vld [vmem:[%s0 + $0xc] sm:$0xf]
    %v121 = vld [vmem:[%s0 + $0x10] sm:$0xf]
    %v122 = vld [vmem:[%s0 + $0x14] sm:$0xf]
    %v123 = vld [vmem:[%s0 + $0x18] sm:$0xf]
    %v124 = vld [vmem:[%s0 + $0x1c] sm:$0xf]
    %v125 = vunpack.c.l.bf16 %v117
    %v126 = vunpack.c.l.bf16 %v118
    %v127 = vunpack.c.l.bf16 %v119
    %v128 = vunpack.c.l.bf16 %v120
    %v129 = vunpack.c.l.bf16 %v121
    %v130 = vunpack.c.l.bf16 %v122
    %v131 = vunpack.c.l.bf16 %v123
    %v132 = vunpack.c.l.bf16 %v124
    %vm133 = vcmask 523264
    %134 = vst.msk [vmem:[#allocation2] sm:$0xff] %vm133, %v125
    %135 = vst.msk [vmem:[#allocation2 + $0x10] sm:$0xff] %vm133, %v126
    %136 = vst.msk [vmem:[#allocation2 + $0x20] sm:$0xff] %vm133, %v127
    %137 = vst.msk [vmem:[#allocation2 + $0x30] sm:$0xff] %vm133, %v128
    %138 = vst.msk [vmem:[#allocation2 + $0x40] sm:$0xff] %vm133, %v129
    %139 = vst.msk [vmem:[#allocation2 + $0x50] sm:$0xff] %vm133, %v130
    %140 = vst.msk [vmem:[#allocation2 + $0x60] sm:$0xff] %vm133, %v131
    %141 = vst.msk [vmem:[#allocation2 + $0x70] sm:$0xff] %vm133, %v132
    %v142 = vld [vmem:[%s1] sm:$0xff]
    %v143 = vld [vmem:[%s1 + $0x8] sm:$0xff]
    %v144 = vld [vmem:[%s1 + $0x10] sm:$0xff]
    %v145 = vld [vmem:[%s1 + $0x18] sm:$0xff]
    %v146 = vld [vmem:[%s1 + $0x20] sm:$0xff]
    %v147 = vld [vmem:[%s1 + $0x28] sm:$0xff]
    %v148 = vld [vmem:[%s1 + $0x30] sm:$0xff]
    %v149 = vld [vmem:[%s1 + $0x38] sm:$0xff]
    %vm150 = vcmask 261120
    %151 = vst.msk [vmem:[#allocation3] sm:$0xff] %vm150, %v142
    %152 = vst.msk [vmem:[#allocation3 + $0x8] sm:$0xff] %vm150, %v143
    %153 = vst.msk [vmem:[#allocation3 + $0x10] sm:$0xff] %vm150, %v144
    %154 = vst.msk [vmem:[#allocation3 + $0x18] sm:$0xff] %vm150, %v145
    %155 = vst.msk [vmem:[#allocation3 + $0x20] sm:$0xff] %vm150, %v146
    %156 = vst.msk [vmem:[#allocation3 + $0x28] sm:$0xff] %vm150, %v147
    %157 = vst.msk [vmem:[#allocation3 + $0x30] sm:$0xff] %vm150, %v148
    %158 = vst.msk [vmem:[#allocation3 + $0x38] sm:$0xff] %vm150, %v149
    %s159 = scalar_lea.vmem %s0, 32
    %v160 = vld [vmem:[%s159] sm:$0xf]
    %v161 = vld [vmem:[%s159 + $0x4] sm:$0xf]
    %v162 = vld [vmem:[%s159 + $0x8] sm:$0xf]
    %v163 = vld [vmem:[%s159 + $0xc] sm:$0xf]
    %v164 = vld [vmem:[%s159 + $0x10] sm:$0xf]
    %v165 = vld [vmem:[%s159 + $0x14] sm:$0xf]
    %v166 = vld [vmem:[%s159 + $0x18] sm:$0xf]
    %v167 = vld [vmem:[%s159 + $0x1c] sm:$0xf]
    %v168 = vunpack.c.l.bf16 %v160
    %v169 = vunpack.c.l.bf16 %v161
    %v170 = vunpack.c.l.bf16 %v162
    %v171 = vunpack.c.l.bf16 %v163
    %v172 = vunpack.c.l.bf16 %v164
    %v173 = vunpack.c.l.bf16 %v165
    %v174 = vunpack.c.l.bf16 %v166
    %v175 = vunpack.c.l.bf16 %v167
    %184 = vrot.lane.b32.xlu0 %v168, 64
    %v185 = vpop.permute.xlu0 %184
    %186 = vrot.lane.b32.xlu0 %v169, 64
    %v187 = vpop.permute.xlu0 %186
    %188 = vrot.lane.b32.xlu0 %v170, 64
    %v189 = vpop.permute.xlu0 %188
    %190 = vrot.lane.b32.xlu0 %v171, 64
    %v191 = vpop.permute.xlu0 %190
    %192 = vrot.lane.b32.xlu0 %v172, 64
    %v193 = vpop.permute.xlu0 %192
    %194 = vrot.lane.b32.xlu0 %v173, 64
    %v195 = vpop.permute.xlu0 %194
    %196 = vrot.lane.b32.xlu0 %v174, 64
    %v197 = vpop.permute.xlu0 %196
    %198 = vrot.lane.b32.xlu0 %v175, 64
    %v199 = vpop.permute.xlu0 %198
    %vm208 = vcmask 1048064
    %209 = vst.msk [vmem:[#allocation2 + $0x80] sm:$0xff] %vm208, %v185
    %210 = vst.msk [vmem:[#allocation2 + $0x90] sm:$0xff] %vm208, %v187
    %211 = vst.msk [vmem:[#allocation2 + $0xa0] sm:$0xff] %vm208, %v189
    %212 = vst.msk [vmem:[#allocation2 + $0xb0] sm:$0xff] %vm208, %v191
    %213 = vst.msk [vmem:[#allocation2 + $0xc0] sm:$0xff] %vm208, %v193
    %214 = vst.msk [vmem:[#allocation2 + $0xd0] sm:$0xff] %vm208, %v195
    %215 = vst.msk [vmem:[#allocation2 + $0xe0] sm:$0xff] %vm208, %v197
    %216 = vst.msk [vmem:[#allocation2 + $0xf0] sm:$0xff] %vm208, %v199
    %s217 = scalar_lea.vmem %s1, 64
    %v218 = vld [vmem:[%s217] sm:$0xff]
    %v219 = vld [vmem:[%s217 + $0x8] sm:$0xff]
    %v220 = vld [vmem:[%s217 + $0x10] sm:$0xff]
    %v221 = vld [vmem:[%s217 + $0x18] sm:$0xff]
    %v222 = vld [vmem:[%s217 + $0x20] sm:$0xff]
    %v223 = vld [vmem:[%s217 + $0x28] sm:$0xff]
    %v224 = vld [vmem:[%s217 + $0x30] sm:$0xff]
    %v225 = vld [vmem:[%s217 + $0x38] sm:$0xff]
    %226 = vst.msk [vmem:[#allocation3 + $0x40] sm:$0xff] %vm150, %v218
    %227 = vst.msk [vmem:[#allocation3 + $0x48] sm:$0xff] %vm150, %v219
    %228 = vst.msk [vmem:[#allocation3 + $0x50] sm:$0xff] %vm150, %v220
    %229 = vst.msk [vmem:[#allocation3 + $0x58] sm:$0xff] %vm150, %v221
    %230 = vst.msk [vmem:[#allocation3 + $0x60] sm:$0xff] %vm150, %v222
    %231 = vst.msk [vmem:[#allocation3 + $0x68] sm:$0xff] %vm150, %v223
    %232 = vst.msk [vmem:[#allocation3 + $0x70] sm:$0xff] %vm150, %v224
    %233 = vst.msk [vmem:[#allocation3 + $0x78] sm:$0xff] %vm150, %v225
    %s234 = scalar_lea.vmem %s0, 64
    %v235 = vld [vmem:[%s234] sm:$0xf]
    %v236 = vld [vmem:[%s234 + $0x4] sm:$0xf]
    %v237 = vld [vmem:[%s234 + $0x8] sm:$0xf]
    %v238 = vld [vmem:[%s234 + $0xc] sm:$0xf]
    %v239 = vld [vmem:[%s234 + $0x10] sm:$0xf]
    %v240 = vld [vmem:[%s234 + $0x14] sm:$0xf]
    %v241 = vld [vmem:[%s234 + $0x18] sm:$0xf]
    %v242 = vld [vmem:[%s234 + $0x1c] sm:$0xf]
    %v243 = vunpack.c.l.bf16 %v235
    %v244 = vunpack.c.l.bf16 %v236
    %v245 = vunpack.c.l.bf16 %v237
    %v246 = vunpack.c.l.bf16 %v238
    %v247 = vunpack.c.l.bf16 %v239
    %v248 = vunpack.c.l.bf16 %v240
    %v249 = vunpack.c.l.bf16 %v241
    %v250 = vunpack.c.l.bf16 %v242
    %251 = vst.msk [vmem:[#allocation2 + $0x108] sm:$0xff] %vm133, %v243
    %252 = vst.msk [vmem:[#allocation2 + $0x118] sm:$0xff] %vm133, %v244
    %253 = vst.msk [vmem:[#allocation2 + $0x128] sm:$0xff] %vm133, %v245
    %254 = vst.msk [vmem:[#allocation2 + $0x138] sm:$0xff] %vm133, %v246
    %255 = vst.msk [vmem:[#allocation2 + $0x148] sm:$0xff] %vm133, %v247
    %256 = vst.msk [vmem:[#allocation2 + $0x158] sm:$0xff] %vm133, %v248
    %257 = vst.msk [vmem:[#allocation2 + $0x168] sm:$0xff] %vm133, %v249
    %258 = vst.msk [vmem:[#allocation2 + $0x178] sm:$0xff] %vm133, %v250
    %s259 = scalar_lea.vmem %s1, 128
    %v260 = vld [vmem:[%s259] sm:$0xff]
    %v261 = vld [vmem:[%s259 + $0x8] sm:$0xff]
    %v262 = vld [vmem:[%s259 + $0x10] sm:$0xff]
    %v263 = vld [vmem:[%s259 + $0x18] sm:$0xff]
    %v264 = vld [vmem:[%s259 + $0x20] sm:$0xff]
    %v265 = vld [vmem:[%s259 + $0x28] sm:$0xff]
    %v266 = vld [vmem:[%s259 + $0x30] sm:$0xff]
    %v267 = vld [vmem:[%s259 + $0x38] sm:$0xff]
    %268 = vst.msk [vmem:[#allocation3 + $0x80] sm:$0xff] %vm150, %v260
    %269 = vst.msk [vmem:[#allocation3 + $0x88] sm:$0xff] %vm150, %v261
    %270 = vst.msk [vmem:[#allocation3 + $0x90] sm:$0xff] %vm150, %v262
    %271 = vst.msk [vmem:[#allocation3 + $0x98] sm:$0xff] %vm150, %v263
    %272 = vst.msk [vmem:[#allocation3 + $0xa0] sm:$0xff] %vm150, %v264
    %273 = vst.msk [vmem:[#allocation3 + $0xa8] sm:$0xff] %vm150, %v265
    %274 = vst.msk [vmem:[#allocation3 + $0xb0] sm:$0xff] %vm150, %v266
    %275 = vst.msk [vmem:[#allocation3 + $0xb8] sm:$0xff] %vm150, %v267
    %s276 = scalar_lea.vmem %s0, 96
    %v277 = vld [vmem:[%s276] sm:$0xf]
    %v278 = vld [vmem:[%s276 + $0x4] sm:$0xf]
    %v279 = vld [vmem:[%s276 + $0x8] sm:$0xf]
    %v280 = vld [vmem:[%s276 + $0xc] sm:$0xf]
    %v281 = vld [vmem:[%s276 + $0x10] sm:$0xf]
    %v282 = vld [vmem:[%s276 + $0x14] sm:$0xf]
    %v283 = vld [vmem:[%s276 + $0x18] sm:$0xf]
    %v284 = vld [vmem:[%s276 + $0x1c] sm:$0xf]
    %v285 = vunpack.c.l.bf16 %v277
    %v286 = vunpack.c.l.bf16 %v278
    %v287 = vunpack.c.l.bf16 %v279
    %v288 = vunpack.c.l.bf16 %v280
    %v289 = vunpack.c.l.bf16 %v281
    %v290 = vunpack.c.l.bf16 %v282
    %v291 = vunpack.c.l.bf16 %v283
    %v292 = vunpack.c.l.bf16 %v284
    %301 = vrot.lane.b32.xlu0 %v285, 64
    %v302 = vpop.permute.xlu0 %301
    %303 = vrot.lane.b32.xlu0 %v286, 64
    %v304 = vpop.permute.xlu0 %303
    %305 = vrot.lane.b32.xlu0 %v287, 64
    %v306 = vpop.permute.xlu0 %305
    %307 = vrot.lane.b32.xlu0 %v288, 64
    %v308 = vpop.permute.xlu0 %307
    %309 = vrot.lane.b32.xlu0 %v289, 64
    %v310 = vpop.permute.xlu0 %309
    %311 = vrot.lane.b32.xlu0 %v290, 64
    %v312 = vpop.permute.xlu0 %311
    %313 = vrot.lane.b32.xlu0 %v291, 64
    %v314 = vpop.permute.xlu0 %313
    %315 = vrot.lane.b32.xlu0 %v292, 64
    %v316 = vpop.permute.xlu0 %315
    %325 = vst.msk [vmem:[#allocation2 + $0x188] sm:$0xff] %vm208, %v302
    %326 = vst.msk [vmem:[#allocation2 + $0x198] sm:$0xff] %vm208, %v304
    %327 = vst.msk [vmem:[#allocation2 + $0x1a8] sm:$0xff] %vm208, %v306
    %328 = vst.msk [vmem:[#allocation2 + $0x1b8] sm:$0xff] %vm208, %v308
    %329 = vst.msk [vmem:[#allocation2 + $0x1c8] sm:$0xff] %vm208, %v310
    %330 = vst.msk [vmem:[#allocation2 + $0x1d8] sm:$0xff] %vm208, %v312
    %331 = vst.msk [vmem:[#allocation2 + $0x1e8] sm:$0xff] %vm208, %v314
    %332 = vst.msk [vmem:[#allocation2 + $0x1f8] sm:$0xff] %vm208, %v316
    %s333 = scalar_lea.vmem %s1, 192
    %v334 = vld [vmem:[%s333] sm:$0xff]
    %v335 = vld [vmem:[%s333 + $0x8] sm:$0xff]
    %v336 = vld [vmem:[%s333 + $0x10] sm:$0xff]
    %v337 = vld [vmem:[%s333 + $0x18] sm:$0xff]
    %v338 = vld [vmem:[%s333 + $0x20] sm:$0xff]
    %v339 = vld [vmem:[%s333 + $0x28] sm:$0xff]
    %v340 = vld [vmem:[%s333 + $0x30] sm:$0xff]
    %v341 = vld [vmem:[%s333 + $0x38] sm:$0xff]
    %342 = vst.msk [vmem:[#allocation3 + $0xc0] sm:$0xff] %vm150, %v334
    %343 = vst.msk [vmem:[#allocation3 + $0xc8] sm:$0xff] %vm150, %v335
    %344 = vst.msk [vmem:[#allocation3 + $0xd0] sm:$0xff] %vm150, %v336
    %345 = vst.msk [vmem:[#allocation3 + $0xd8] sm:$0xff] %vm150, %v337
    %346 = vst.msk [vmem:[#allocation3 + $0xe0] sm:$0xff] %vm150, %v338
    %347 = vst.msk [vmem:[#allocation3 + $0xe8] sm:$0xff] %vm150, %v339
    %348 = vst.msk [vmem:[#allocation3 + $0xf0] sm:$0xff] %vm150, %v340
    %349 = vst.msk [vmem:[#allocation3 + $0xf8] sm:$0xff] %vm150, %v341
    %v350 = vld [vmem:[#allocation2] sm:$0xff]
    %v351 = vld [vmem:[#allocation2 + $0x8] sm:$0xff]
    %v352 = vld [vmem:[#allocation2 + $0x10] sm:$0xff]
    %v353 = vld [vmem:[#allocation2 + $0x18] sm:$0xff]
    %v354 = vld [vmem:[#allocation2 + $0x20] sm:$0xff]
    %v355 = vld [vmem:[#allocation2 + $0x28] sm:$0xff]
    %v356 = vld [vmem:[#allocation2 + $0x30] sm:$0xff]
    %v357 = vld [vmem:[#allocation2 + $0x38] sm:$0xff]
    %v358 = vld [vmem:[#allocation2 + $0x40] sm:$0xff]
    %v359 = vld [vmem:[#allocation2 + $0x48] sm:$0xff]
    %v360 = vld [vmem:[#allocation2 + $0x50] sm:$0xff]
    %v361 = vld [vmem:[#allocation2 + $0x58] sm:$0xff]
    %v362 = vld [vmem:[#allocation2 + $0x60] sm:$0xff]
    %v363 = vld [vmem:[#allocation2 + $0x68] sm:$0xff]
    %v364 = vld [vmem:[#allocation2 + $0x70] sm:$0xff]
    %v365 = vld [vmem:[#allocation2 + $0x78] sm:$0xff]
    %v366 = vld [vmem:[#allocation2 + $0x80] sm:$0xff]
    %v367 = vld [vmem:[#allocation2 + $0x88] sm:$0xff]
    %v368 = vld [vmem:[#allocation2 + $0x90] sm:$0xff]
    %v369 = vld [vmem:[#allocation2 + $0x98] sm:$0xff]
    %v370 = vld [vmem:[#allocation2 + $0xa0] sm:$0xff]
    %v371 = vld [vmem:[#allocation2 + $0xa8] sm:$0xff]
    %v372 = vld [vmem:[#allocation2 + $0xb0] sm:$0xff]
    %v373 = vld [vmem:[#allocation2 + $0xb8] sm:$0xff]
    %v374 = vld [vmem:[#allocation2 + $0xc0] sm:$0xff]
    %v375 = vld [vmem:[#allocation2 + $0xc8] sm:$0xff]
    %v376 = vld [vmem:[#allocation2 + $0xd0] sm:$0xff]
    %v377 = vld [vmem:[#allocation2 + $0xd8] sm:$0xff]
    %v378 = vld [vmem:[#allocation2 + $0xe0] sm:$0xff]
    %v379 = vld [vmem:[#allocation2 + $0xe8] sm:$0xff]
    %v380 = vld [vmem:[#allocation2 + $0xf0] sm:$0xff]
    %v381 = vld [vmem:[#allocation2 + $0xf8] sm:$0xff]
    %v382 = vld [vmem:[#allocation2 + $0x100] sm:$0xff]
    %v383 = vld [vmem:[#allocation2 + $0x108] sm:$0xff]
    %v384 = vld [vmem:[#allocation2 + $0x110] sm:$0xff]
    %v385 = vld [vmem:[#allocation2 + $0x118] sm:$0xff]
    %v386 = vld [vmem:[#allocation2 + $0x120] sm:$0xff]
    %v387 = vld [vmem:[#allocation2 + $0x128] sm:$0xff]
    %v388 = vld [vmem:[#allocation2 + $0x130] sm:$0xff]
    %v389 = vld [vmem:[#allocation2 + $0x138] sm:$0xff]
    %v390 = vld [vmem:[#allocation2 + $0x140] sm:$0xff]
    %v391 = vld [vmem:[#allocation2 + $0x148] sm:$0xff]
    %v392 = vld [vmem:[#allocation2 + $0x150] sm:$0xff]
    %v393 = vld [vmem:[#allocation2 + $0x158] sm:$0xff]
    %v394 = vld [vmem:[#allocation2 + $0x160] sm:$0xff]
    %v395 = vld [vmem:[#allocation2 + $0x168] sm:$0xff]
    %v396 = vld [vmem:[#allocation2 + $0x170] sm:$0xff]
    %v397 = vld [vmem:[#allocation2 + $0x178] sm:$0xff]
    %v398 = vld [vmem:[#allocation2 + $0x180] sm:$0xff]
    %v399 = vld [vmem:[#allocation2 + $0x188] sm:$0xff]
    %v400 = vld [vmem:[#allocation2 + $0x190] sm:$0xff]
    %v401 = vld [vmem:[#allocation2 + $0x198] sm:$0xff]
    %v402 = vld [vmem:[#allocation2 + $0x1a0] sm:$0xff]
    %v403 = vld [vmem:[#allocation2 + $0x1a8] sm:$0xff]
    %v404 = vld [vmem:[#allocation2 + $0x1b0] sm:$0xff]
    %v405 = vld [vmem:[#allocation2 + $0x1b8] sm:$0xff]
    %v406 = vld [vmem:[#allocation2 + $0x1c0] sm:$0xff]
    %v407 = vld [vmem:[#allocation2 + $0x1c8] sm:$0xff]
    %v408 = vld [vmem:[#allocation2 + $0x1d0] sm:$0xff]
    %v409 = vld [vmem:[#allocation2 + $0x1d8] sm:$0xff]
    %v410 = vld [vmem:[#allocation2 + $0x1e0] sm:$0xff]
    %v411 = vld [vmem:[#allocation2 + $0x1e8] sm:$0xff]
    %v412 = vld [vmem:[#allocation2 + $0x1f0] sm:$0xff]
    %v413 = vld [vmem:[#allocation2 + $0x1f8] sm:$0xff]
    %v414 = vld [vmem:[#allocation3] sm:$0xff]
    %v415 = vld [vmem:[#allocation3 + $0x8] sm:$0xff]
    %v416 = vld [vmem:[#allocation3 + $0x10] sm:$0xff]
    %v417 = vld [vmem:[#allocation3 + $0x18] sm:$0xff]
    %v418 = vld [vmem:[#allocation3 + $0x20] sm:$0xff]
    %v419 = vld [vmem:[#allocation3 + $0x28] sm:$0xff]
    %v420 = vld [vmem:[#allocation3 + $0x30] sm:$0xff]
    %v421 = vld [vmem:[#allocation3 + $0x38] sm:$0xff]
    %v422 = vld [vmem:[#allocation3 + $0x40] sm:$0xff]
    %v423 = vld [vmem:[#allocation3 + $0x48] sm:$0xff]
    %v424 = vld [vmem:[#allocation3 + $0x50] sm:$0xff]
    %v425 = vld [vmem:[#allocation3 + $0x58] sm:$0xff]
    %v426 = vld [vmem:[#allocation3 + $0x60] sm:$0xff]
    %v427 = vld [vmem:[#allocation3 + $0x68] sm:$0xff]
    %v428 = vld [vmem:[#allocation3 + $0x70] sm:$0xff]
    %v429 = vld [vmem:[#allocation3 + $0x78] sm:$0xff]
    %v430 = vld [vmem:[#allocation3 + $0x80] sm:$0xff]
    %v431 = vld [vmem:[#allocation3 + $0x88] sm:$0xff]
    %v432 = vld [vmem:[#allocation3 + $0x90] sm:$0xff]
    %v433 = vld [vmem:[#allocation3 + $0x98] sm:$0xff]
    %v434 = vld [vmem:[#allocation3 + $0xa0] sm:$0xff]
    %v435 = vld [vmem:[#allocation3 + $0xa8] sm:$0xff]
    %v436 = vld [vmem:[#allocation3 + $0xb0] sm:$0xff]
    %v437 = vld [vmem:[#allocation3 + $0xb8] sm:$0xff]
    %v438 = vld [vmem:[#allocation3 + $0xc0] sm:$0xff]
    %v439 = vld [vmem:[#allocation3 + $0xc8] sm:$0xff]
    %v440 = vld [vmem:[#allocation3 + $0xd0] sm:$0xff]
    %v441 = vld [vmem:[#allocation3 + $0xd8] sm:$0xff]
    %v442 = vld [vmem:[#allocation3 + $0xe0] sm:$0xff]
    %v443 = vld [vmem:[#allocation3 + $0xe8] sm:$0xff]
    %v444 = vld [vmem:[#allocation3 + $0xf0] sm:$0xff]
    %v445 = vld [vmem:[#allocation3 + $0xf8] sm:$0xff]
    %v446 = vadd.f32 %v350, %v351
    %447 = vadd.xlane.f32.xlu0 %v446
    %v448 = vpop.xlane.xlu0 %447
    %v449 = vadd.f32 %v352, %v353
    %450 = vadd.xlane.f32.xlu0 %v449
    %v451 = vpop.xlane.xlu0 %450
    %v452 = vadd.f32 %v354, %v355
    %453 = vadd.xlane.f32.xlu0 %v452
    %v454 = vpop.xlane.xlu0 %453
    %v455 = vadd.f32 %v356, %v357
    %456 = vadd.xlane.f32.xlu0 %v455
    %v457 = vpop.xlane.xlu0 %456
    %v458 = vadd.f32 %v358, %v359
    %459 = vadd.xlane.f32.xlu0 %v458
    %v460 = vpop.xlane.xlu0 %459
    %v461 = vadd.f32 %v360, %v361
    %462 = vadd.xlane.f32.xlu0 %v461
    %v463 = vpop.xlane.xlu0 %462
    %v464 = vadd.f32 %v362, %v363
    %465 = vadd.xlane.f32.xlu0 %v464
    %v466 = vpop.xlane.xlu0 %465
    %v467 = vadd.f32 %v364, %v365
    %468 = vadd.xlane.f32.xlu0 %v467
    %v469 = vpop.xlane.xlu0 %468
    %v470 = vadd.f32 %v366, %v367
    %471 = vadd.xlane.f32.xlu0 %v470
    %v472 = vpop.xlane.xlu0 %471
    %v473 = vadd.f32 %v368, %v369
    %474 = vadd.xlane.f32.xlu0 %v473
    %v475 = vpop.xlane.xlu0 %474
    %v476 = vadd.f32 %v370, %v371
    %477 = vadd.xlane.f32.xlu0 %v476
    %v478 = vpop.xlane.xlu0 %477
    %v479 = vadd.f32 %v372, %v373
    %480 = vadd.xlane.f32.xlu0 %v479
    %v481 = vpop.xlane.xlu0 %480
    %v482 = vadd.f32 %v374, %v375
    %483 = vadd.xlane.f32.xlu0 %v482
    %v484 = vpop.xlane.xlu0 %483
    %v485 = vadd.f32 %v376, %v377
    %486 = vadd.xlane.f32.xlu0 %v485
    %v487 = vpop.xlane.xlu0 %486
    %v488 = vadd.f32 %v378, %v379
    %489 = vadd.xlane.f32.xlu0 %v488
    %v490 = vpop.xlane.xlu0 %489
    %v491 = vadd.f32 %v380, %v381
    %492 = vadd.xlane.f32.xlu0 %v491
    %v493 = vpop.xlane.xlu0 %492
    %v494 = vadd.f32 %v382, %v383
    %495 = vadd.xlane.f32.xlu0 %v494
    %v496 = vpop.xlane.xlu0 %495
    %v497 = vadd.f32 %v384, %v385
    %498 = vadd.xlane.f32.xlu0 %v497
    %v499 = vpop.xlane.xlu0 %498
    %v500 = vadd.f32 %v386, %v387
    %501 = vadd.xlane.f32.xlu0 %v500
    %v502 = vpop.xlane.xlu0 %501
    %v503 = vadd.f32 %v388, %v389
    %504 = vadd.xlane.f32.xlu0 %v503
    %v505 = vpop.xlane.xlu0 %504
    %v506 = vadd.f32 %v390, %v391
    %507 = vadd.xlane.f32.xlu0 %v506
    %v508 = vpop.xlane.xlu0 %507
    %v509 = vadd.f32 %v392, %v393
    %510 = vadd.xlane.f32.xlu0 %v509
    %v511 = vpop.xlane.xlu0 %510
    %v512 = vadd.f32 %v394, %v395
    %513 = vadd.xlane.f32.xlu0 %v512
    %v514 = vpop.xlane.xlu0 %513
    %v515 = vadd.f32 %v396, %v397
    %516 = vadd.xlane.f32.xlu0 %v515
    %v517 = vpop.xlane.xlu0 %516
    %v518 = vadd.f32 %v398, %v399
    %519 = vadd.xlane.f32.xlu0 %v518
    %v520 = vpop.xlane.xlu0 %519
    %v521 = vadd.f32 %v400, %v401
    %522 = vadd.xlane.f32.xlu0 %v521
    %v523 = vpop.xlane.xlu0 %522
    %v524 = vadd.f32 %v402, %v403
    %525 = vadd.xlane.f32.xlu0 %v524
    %v526 = vpop.xlane.xlu0 %525
    %v527 = vadd.f32 %v404, %v405
    %528 = vadd.xlane.f32.xlu0 %v527
    %v529 = vpop.xlane.xlu0 %528
    %v530 = vadd.f32 %v406, %v407
    %531 = vadd.xlane.f32.xlu0 %v530
    %v532 = vpop.xlane.xlu0 %531
    %v533 = vadd.f32 %v408, %v409
    %534 = vadd.xlane.f32.xlu0 %v533
    %v535 = vpop.xlane.xlu0 %534
    %v536 = vadd.f32 %v410, %v411
    %537 = vadd.xlane.f32.xlu0 %v536
    %v538 = vpop.xlane.xlu0 %537
    %v539 = vadd.f32 %v412, %v413
    %540 = vadd.xlane.f32.xlu0 %v539
    %v541 = vpop.xlane.xlu0 %540
    %v542 = vmax.f32 %v448, 1.0
    %v543 = vmax.f32 %v451, 1.0
    %v544 = vmax.f32 %v454, 1.0
    %v545 = vmax.f32 %v457, 1.0
    %v546 = vmax.f32 %v460, 1.0
    %v547 = vmax.f32 %v463, 1.0
    %v548 = vmax.f32 %v466, 1.0
    %v549 = vmax.f32 %v469, 1.0
    %v550 = vmax.f32 %v472, 1.0
    %v551 = vmax.f32 %v475, 1.0
    %v552 = vmax.f32 %v478, 1.0
    %v553 = vmax.f32 %v481, 1.0
    %v554 = vmax.f32 %v484, 1.0
    %v555 = vmax.f32 %v487, 1.0
    %v556 = vmax.f32 %v490, 1.0
    %v557 = vmax.f32 %v493, 1.0
    %v558 = vmax.f32 %v496, 1.0
    %v559 = vmax.f32 %v499, 1.0
    %v560 = vmax.f32 %v502, 1.0
    %v561 = vmax.f32 %v505, 1.0
    %v562 = vmax.f32 %v508, 1.0
    %v563 = vmax.f32 %v511, 1.0
    %v564 = vmax.f32 %v514, 1.0
    %v565 = vmax.f32 %v517, 1.0
    %v566 = vmax.f32 %v520, 1.0
    %v567 = vmax.f32 %v523, 1.0
    %v568 = vmax.f32 %v526, 1.0
    %v569 = vmax.f32 %v529, 1.0
    %v570 = vmax.f32 %v532, 1.0
    %v571 = vmax.f32 %v535, 1.0
    %v572 = vmax.f32 %v538, 1.0
    %v573 = vmax.f32 %v541, 1.0
    %v574 = vrsqrt.pop %v542
    %v575 = vmul.f32 %v574, %v542
    %v576 = vmul.f32 %v575, %v574
    %v577 = vmul.f32 0.5, %v576
    %v578 = vsub.f32 1.5, %v577
    %v579 = vmul.f32 %v574, %v578
    %vm580 = vweird.f32 %v542
    %vm581 = vweird.f32 %v574
    %vm582 = vmor %vm580, %vm581
    %v583 = vsel %vm582, %v574, %v579
    %v584 = vrsqrt.pop %v543
    %v585 = vmul.f32 %v584, %v543
    %v586 = vmul.f32 %v585, %v584
    %v587 = vmul.f32 0.5, %v586
    %v588 = vsub.f32 1.5, %v587
    %v589 = vmul.f32 %v584, %v588
    %vm590 = vweird.f32 %v543
    %vm591 = vweird.f32 %v584
    %vm592 = vmor %vm590, %vm591
    %v593 = vsel %vm592, %v584, %v589
    %v594 = vrsqrt.pop %v544
    %v595 = vmul.f32 %v594, %v544
    %v596 = vmul.f32 %v595, %v594
    %v597 = vmul.f32 0.5, %v596
    %v598 = vsub.f32 1.5, %v597
    %v599 = vmul.f32 %v594, %v598
    %vm600 = vweird.f32 %v544
    %vm601 = vweird.f32 %v594
    %vm602 = vmor %vm600, %vm601
    %v603 = vsel %vm602, %v594, %v599
    %v604 = vrsqrt.pop %v545
    %v605 = vmul.f32 %v604, %v545
    %v606 = vmul.f32 %v605, %v604
    %v607 = vmul.f32 0.5, %v606
    %v608 = vsub.f32 1.5, %v607
    %v609 = vmul.f32 %v604, %v608
    %vm610 = vweird.f32 %v545
    %vm611 = vweird.f32 %v604
    %vm612 = vmor %vm610, %vm611
    %v613 = vsel %vm612, %v604, %v609
    %v614 = vrsqrt.pop %v546
    %v615 = vmul.f32 %v614, %v546
    %v616 = vmul.f32 %v615, %v614
    %v617 = vmul.f32 0.5, %v616
    %v618 = vsub.f32 1.5, %v617
    %v619 = vmul.f32 %v614, %v618
    %vm620 = vweird.f32 %v546
    %vm621 = vweird.f32 %v614
    %vm622 = vmor %vm620, %vm621
    %v623 = vsel %vm622, %v614, %v619
    %v624 = vrsqrt.pop %v547
    %v625 = vmul.f32 %v624, %v547
    %v626 = vmul.f32 %v625, %v624
    %v627 = vmul.f32 0.5, %v626
    %v628 = vsub.f32 1.5, %v627
    %v629 = vmul.f32 %v624, %v628
    %vm630 = vweird.f32 %v547
    %vm631 = vweird.f32 %v624
    %vm632 = vmor %vm630, %vm631
    %v633 = vsel %vm632, %v624, %v629
    %v634 = vrsqrt.pop %v548
    %v635 = vmul.f32 %v634, %v548
    %v636 = vmul.f32 %v635, %v634
    %v637 = vmul.f32 0.5, %v636
    %v638 = vsub.f32 1.5, %v637
    %v639 = vmul.f32 %v634, %v638
    %vm640 = vweird.f32 %v548
    %vm641 = vweird.f32 %v634
    %vm642 = vmor %vm640, %vm641
    %v643 = vsel %vm642, %v634, %v639
    %v644 = vrsqrt.pop %v549
    %v645 = vmul.f32 %v644, %v549
    %v646 = vmul.f32 %v645, %v644
    %v647 = vmul.f32 0.5, %v646
    %v648 = vsub.f32 1.5, %v647
    %v649 = vmul.f32 %v644, %v648
    %vm650 = vweird.f32 %v549
    %vm651 = vweird.f32 %v644
    %vm652 = vmor %vm650, %vm651
    %v653 = vsel %vm652, %v644, %v649
    %v654 = vrsqrt.pop %v550
    %v655 = vmul.f32 %v654, %v550
    %v656 = vmul.f32 %v655, %v654
    %v657 = vmul.f32 0.5, %v656
    %v658 = vsub.f32 1.5, %v657
    %v659 = vmul.f32 %v654, %v658
    %vm660 = vweird.f32 %v550
    %vm661 = vweird.f32 %v654
    %vm662 = vmor %vm660, %vm661
    %v663 = vsel %vm662, %v654, %v659
    %v664 = vrsqrt.pop %v551
    %v665 = vmul.f32 %v664, %v551
    %v666 = vmul.f32 %v665, %v664
    %v667 = vmul.f32 0.5, %v666
    %v668 = vsub.f32 1.5, %v667
    %v669 = vmul.f32 %v664, %v668
    %vm670 = vweird.f32 %v551
    %vm671 = vweird.f32 %v664
    %vm672 = vmor %vm670, %vm671
    %v673 = vsel %vm672, %v664, %v669
    %v674 = vrsqrt.pop %v552
    %v675 = vmul.f32 %v674, %v552
    %v676 = vmul.f32 %v675, %v674
    %v677 = vmul.f32 0.5, %v676
    %v678 = vsub.f32 1.5, %v677
    %v679 = vmul.f32 %v674, %v678
    %vm680 = vweird.f32 %v552
    %vm681 = vweird.f32 %v674
    %vm682 = vmor %vm680, %vm681
    %v683 = vsel %vm682, %v674, %v679
    %v684 = vrsqrt.pop %v553
    %v685 = vmul.f32 %v684, %v553
    %v686 = vmul.f32 %v685, %v684
    %v687 = vmul.f32 0.5, %v686
    %v688 = vsub.f32 1.5, %v687
    %v689 = vmul.f32 %v684, %v688
    %vm690 = vweird.f32 %v553
    %vm691 = vweird.f32 %v684
    %vm692 = vmor %vm690, %vm691
    %v693 = vsel %vm692, %v684, %v689
    %v694 = vrsqrt.pop %v554
    %v695 = vmul.f32 %v694, %v554
    %v696 = vmul.f32 %v695, %v694
    %v697 = vmul.f32 0.5, %v696
    %v698 = vsub.f32 1.5, %v697
    %v699 = vmul.f32 %v694, %v698
    %vm700 = vweird.f32 %v554
    %vm701 = vweird.f32 %v694
    %vm702 = vmor %vm700, %vm701
    %v703 = vsel %vm702, %v694, %v699
    %v704 = vrsqrt.pop %v555
    %v705 = vmul.f32 %v704, %v555
    %v706 = vmul.f32 %v705, %v704
    %v707 = vmul.f32 0.5, %v706
    %v708 = vsub.f32 1.5, %v707
    %v709 = vmul.f32 %v704, %v708
    %vm710 = vweird.f32 %v555
    %vm711 = vweird.f32 %v704
    %vm712 = vmor %vm710, %vm711
    %v713 = vsel %vm712, %v704, %v709
    %v714 = vrsqrt.pop %v556
    %v715 = vmul.f32 %v714, %v556
    %v716 = vmul.f32 %v715, %v714
    %v717 = vmul.f32 0.5, %v716
    %v718 = vsub.f32 1.5, %v717
    %v719 = vmul.f32 %v714, %v718
    %vm720 = vweird.f32 %v556
    %vm721 = vweird.f32 %v714
    %vm722 = vmor %vm720, %vm721
    %v723 = vsel %vm722, %v714, %v719
    %v724 = vrsqrt.pop %v557
    %v725 = vmul.f32 %v724, %v557
    %v726 = vmul.f32 %v725, %v724
    %v727 = vmul.f32 0.5, %v726
    %v728 = vsub.f32 1.5, %v727
    %v729 = vmul.f32 %v724, %v728
    %vm730 = vweird.f32 %v557
    %vm731 = vweird.f32 %v724
    %vm732 = vmor %vm730, %vm731
    %v733 = vsel %vm732, %v724, %v729
    %v734 = vrsqrt.pop %v558
    %v735 = vmul.f32 %v734, %v558
    %v736 = vmul.f32 %v735, %v734
    %v737 = vmul.f32 0.5, %v736
    %v738 = vsub.f32 1.5, %v737
    %v739 = vmul.f32 %v734, %v738
    %vm740 = vweird.f32 %v558
    %vm741 = vweird.f32 %v734
    %vm742 = vmor %vm740, %vm741
    %v743 = vsel %vm742, %v734, %v739
    %v744 = vrsqrt.pop %v559
    %v745 = vmul.f32 %v744, %v559
    %v746 = vmul.f32 %v745, %v744
    %v747 = vmul.f32 0.5, %v746
    %v748 = vsub.f32 1.5, %v747
    %v749 = vmul.f32 %v744, %v748
    %vm750 = vweird.f32 %v559
    %vm751 = vweird.f32 %v744
    %vm752 = vmor %vm750, %vm751
    %v753 = vsel %vm752, %v744, %v749
    %v754 = vrsqrt.pop %v560
    %v755 = vmul.f32 %v754, %v560
    %v756 = vmul.f32 %v755, %v754
    %v757 = vmul.f32 0.5, %v756
    %v758 = vsub.f32 1.5, %v757
    %v759 = vmul.f32 %v754, %v758
    %vm760 = vweird.f32 %v560
    %vm761 = vweird.f32 %v754
    %vm762 = vmor %vm760, %vm761
    %v763 = vsel %vm762, %v754, %v759
    %v764 = vrsqrt.pop %v561
    %v765 = vmul.f32 %v764, %v561
    %v766 = vmul.f32 %v765, %v764
    %v767 = vmul.f32 0.5, %v766
    %v768 = vsub.f32 1.5, %v767
    %v769 = vmul.f32 %v764, %v768
    %vm770 = vweird.f32 %v561
    %vm771 = vweird.f32 %v764
    %vm772 = vmor %vm770, %vm771
    %v773 = vsel %vm772, %v764, %v769
    %v774 = vrsqrt.pop %v562
    %v775 = vmul.f32 %v774, %v562
    %v776 = vmul.f32 %v775, %v774
    %v777 = vmul.f32 0.5, %v776
    %v778 = vsub.f32 1.5, %v777
    %v779 = vmul.f32 %v774, %v778
    %vm780 = vweird.f32 %v562
    %vm781 = vweird.f32 %v774
    %vm782 = vmor %vm780, %vm781
    %v783 = vsel %vm782, %v774, %v779
    %v784 = vrsqrt.pop %v563
    %v785 = vmul.f32 %v784, %v563
    %v786 = vmul.f32 %v785, %v784
    %v787 = vmul.f32 0.5, %v786
    %v788 = vsub.f32 1.5, %v787
    %v789 = vmul.f32 %v784, %v788
    %vm790 = vweird.f32 %v563
    %vm791 = vweird.f32 %v784
    %vm792 = vmor %vm790, %vm791
    %v793 = vsel %vm792, %v784, %v789
    %v794 = vrsqrt.pop %v564
    %v795 = vmul.f32 %v794, %v564
    %v796 = vmul.f32 %v795, %v794
    %v797 = vmul.f32 0.5, %v796
    %v798 = vsub.f32 1.5, %v797
    %v799 = vmul.f32 %v794, %v798
    %vm800 = vweird.f32 %v564
    %vm801 = vweird.f32 %v794
    %vm802 = vmor %vm800, %vm801
    %v803 = vsel %vm802, %v794, %v799
    %v804 = vrsqrt.pop %v565
    %v805 = vmul.f32 %v804, %v565
    %v806 = vmul.f32 %v805, %v804
    %v807 = vmul.f32 0.5, %v806
    %v808 = vsub.f32 1.5, %v807
    %v809 = vmul.f32 %v804, %v808
    %vm810 = vweird.f32 %v565
    %vm811 = vweird.f32 %v804
    %vm812 = vmor %vm810, %vm811
    %v813 = vsel %vm812, %v804, %v809
    %v814 = vrsqrt.pop %v566
    %v815 = vmul.f32 %v814, %v566
    %v816 = vmul.f32 %v815, %v814
    %v817 = vmul.f32 0.5, %v816
    %v818 = vsub.f32 1.5, %v817
    %v819 = vmul.f32 %v814, %v818
    %vm820 = vweird.f32 %v566
    %vm821 = vweird.f32 %v814
    %vm822 = vmor %vm820, %vm821
    %v823 = vsel %vm822, %v814, %v819
    %v824 = vrsqrt.pop %v567
    %v825 = vmul.f32 %v824, %v567
    %v826 = vmul.f32 %v825, %v824
    %v827 = vmul.f32 0.5, %v826
    %v828 = vsub.f32 1.5, %v827
    %v829 = vmul.f32 %v824, %v828
    %vm830 = vweird.f32 %v567
    %vm831 = vweird.f32 %v824
    %vm832 = vmor %vm830, %vm831
    %v833 = vsel %vm832, %v824, %v829
    %v834 = vrsqrt.pop %v568
    %v835 = vmul.f32 %v834, %v568
    %v836 = vmul.f32 %v835, %v834
    %v837 = vmul.f32 0.5, %v836
    %v838 = vsub.f32 1.5, %v837
    %v839 = vmul.f32 %v834, %v838
    %vm840 = vweird.f32 %v568
    %vm841 = vweird.f32 %v834
    %vm842 = vmor %vm840, %vm841
    %v843 = vsel %vm842, %v834, %v839
    %v844 = vrsqrt.pop %v569
    %v845 = vmul.f32 %v844, %v569
    %v846 = vmul.f32 %v845, %v844
    %v847 = vmul.f32 0.5, %v846
    %v848 = vsub.f32 1.5, %v847
    %v849 = vmul.f32 %v844, %v848
    %vm850 = vweird.f32 %v569
    %vm851 = vweird.f32 %v844
    %vm852 = vmor %vm850, %vm851
    %v853 = vsel %vm852, %v844, %v849
    %v854 = vrsqrt.pop %v570
    %v855 = vmul.f32 %v854, %v570
    %v856 = vmul.f32 %v855, %v854
    %v857 = vmul.f32 0.5, %v856
    %v858 = vsub.f32 1.5, %v857
    %v859 = vmul.f32 %v854, %v858
    %vm860 = vweird.f32 %v570
    %vm861 = vweird.f32 %v854
    %vm862 = vmor %vm860, %vm861
    %v863 = vsel %vm862, %v854, %v859
    %v864 = vrsqrt.pop %v571
    %v865 = vmul.f32 %v864, %v571
    %v866 = vmul.f32 %v865, %v864
    %v867 = vmul.f32 0.5, %v866
    %v868 = vsub.f32 1.5, %v867
    %v869 = vmul.f32 %v864, %v868
    %vm870 = vweird.f32 %v571
    %vm871 = vweird.f32 %v864
    %vm872 = vmor %vm870, %vm871
    %v873 = vsel %vm872, %v864, %v869
    %v874 = vrsqrt.pop %v572
    %v875 = vmul.f32 %v874, %v572
    %v876 = vmul.f32 %v875, %v874
    %v877 = vmul.f32 0.5, %v876
    %v878 = vsub.f32 1.5, %v877
    %v879 = vmul.f32 %v874, %v878
    %vm880 = vweird.f32 %v572
    %vm881 = vweird.f32 %v874
    %vm882 = vmor %vm880, %vm881
    %v883 = vsel %vm882, %v874, %v879
    %v884 = vrsqrt.pop %v573
    %v885 = vmul.f32 %v884, %v573
    %v886 = vmul.f32 %v885, %v884
    %v887 = vmul.f32 0.5, %v886
    %v888 = vsub.f32 1.5, %v887
    %v889 = vmul.f32 %v884, %v888
    %vm890 = vweird.f32 %v573
    %vm891 = vweird.f32 %v884
    %vm892 = vmor %vm890, %vm891
    %v893 = vsel %vm892, %v884, %v889
    %v894 = vld [vmem:[%s3] sm:$0xff]
    %v895 = vld [vmem:[%s3 + $0x8] sm:$0xff]
    %v896 = vld [vmem:[%s3 + $0x10] sm:$0xff]
    %v897 = vld [vmem:[%s3 + $0x18] sm:$0xff]
    %v898 = vld [vmem:[%s3 + $0x20] sm:$0xff]
    %v899 = vld [vmem:[%s3 + $0x28] sm:$0xff]
    %v900 = vld [vmem:[%s3 + $0x30] sm:$0xff]
    %v901 = vld [vmem:[%s3 + $0x38] sm:$0xff]
    %v902 = vld [vmem:[%s3 + $0x40] sm:$0xff]
    %v903 = vld [vmem:[%s3 + $0x48] sm:$0xff]
    %v904 = vld [vmem:[%s3 + $0x50] sm:$0xff]
    %v905 = vld [vmem:[%s3 + $0x58] sm:$0xff]
    %v906 = vld [vmem:[%s3 + $0x60] sm:$0xff]
    %v907 = vld [vmem:[%s3 + $0x68] sm:$0xff]
    %v908 = vld [vmem:[%s3 + $0x70] sm:$0xff]
    %v909 = vld [vmem:[%s3 + $0x78] sm:$0xff]
    %v910 = vld [vmem:[%s4] sm:$0x1]
    %v912 = vperm.slane %v910, 0
    %914 = vmatpush.msra.mxu0 %v909
    %915 = vmatpush.msra.mxu0 %v908
    %916 = vmatpush.msra.mxu0 %v907
    %917 = vmatpush.msra.mxu0 %v906
    %918 = vmatpush.msra.mxu0 %v905
    %919 = vmatpush.msra.mxu0 %v904
    %920 = vmatpush.msra.mxu0 %v903
    %921 = vmatpush.msra.mxu0 %v902
    %922 = vmatpush.msra.mxu0 %v901
    %923 = vmatpush.msra.mxu0 %v900
    %924 = vmatpush.msra.mxu0 %v899
    %925 = vmatpush.msra.mxu0 %v898
    %926 = vmatpush.msra.mxu0 %v897
    %927 = vmatpush.msra.mxu0 %v896
    %928 = vmatpush.msra.mxu0 %v895
    %929 = vmatpush.msra.mxu0 %v894
    %930 = vmatmul.f32.gmra.mxu0 %v414
    %v931 = vpop.f32.mrf.mxu0
    %v932 = vadd.f32 %v912, %v931
    %933 = vmatmul.f32.gmra.mxu0 %v415
    %v934 = vpop.f32.mrf.mxu0
    %v935 = vadd.f32 %v912, %v934
    %936 = vmatmul.f32.gmra.mxu0 %v416
    %v937 = vpop.f32.mrf.mxu0
    %v938 = vadd.f32 %v912, %v937
    %939 = vmatmul.f32.gmra.mxu0 %v417
    %v940 = vpop.f32.mrf.mxu0
    %v941 = vadd.f32 %v912, %v940
    %942 = vmatmul.f32.gmra.mxu0 %v418
    %v943 = vpop.f32.mrf.mxu0
    %v944 = vadd.f32 %v912, %v943
    %945 = vmatmul.f32.gmra.mxu0 %v419
    %v946 = vpop.f32.mrf.mxu0
    %v947 = vadd.f32 %v912, %v946
    %948 = vmatmul.f32.gmra.mxu0 %v420
    %v949 = vpop.f32.mrf.mxu0
    %v950 = vadd.f32 %v912, %v949
    %951 = vmatmul.f32.gmra.mxu0 %v421
    %v952 = vpop.f32.mrf.mxu0
    %v953 = vadd.f32 %v912, %v952
    %954 = vmatmul.f32.gmra.mxu0 %v422
    %v955 = vpop.f32.mrf.mxu0
    %v956 = vadd.f32 %v912, %v955
    %957 = vmatmul.f32.gmra.mxu0 %v423
    %v958 = vpop.f32.mrf.mxu0
    %v959 = vadd.f32 %v912, %v958
    %960 = vmatmul.f32.gmra.mxu0 %v424
    %v961 = vpop.f32.mrf.mxu0
    %v962 = vadd.f32 %v912, %v961
    %963 = vmatmul.f32.gmra.mxu0 %v425
    %v964 = vpop.f32.mrf.mxu0
    %v965 = vadd.f32 %v912, %v964
    %966 = vmatmul.f32.gmra.mxu0 %v426
    %v967 = vpop.f32.mrf.mxu0
    %v968 = vadd.f32 %v912, %v967
    %969 = vmatmul.f32.gmra.mxu0 %v427
    %v970 = vpop.f32.mrf.mxu0
    %v971 = vadd.f32 %v912, %v970
    %972 = vmatmul.f32.gmra.mxu0 %v428
    %v973 = vpop.f32.mrf.mxu0
    %v974 = vadd.f32 %v912, %v973
    %975 = vmatmul.f32.gmra.mxu0 %v429
    %v976 = vpop.f32.mrf.mxu0
    %v977 = vadd.f32 %v912, %v976
    %978 = vmatmul.f32.gmra.mxu0 %v430
    %v979 = vpop.f32.mrf.mxu0
    %v980 = vadd.f32 %v912, %v979
    %981 = vmatmul.f32.gmra.mxu0 %v431
    %v982 = vpop.f32.mrf.mxu0
    %v983 = vadd.f32 %v912, %v982
    %984 = vmatmul.f32.gmra.mxu0 %v432
    %v985 = vpop.f32.mrf.mxu0
    %v986 = vadd.f32 %v912, %v985
    %987 = vmatmul.f32.gmra.mxu0 %v433
    %v988 = vpop.f32.mrf.mxu0
    %v989 = vadd.f32 %v912, %v988
    %990 = vmatmul.f32.gmra.mxu0 %v434
    %v991 = vpop.f32.mrf.mxu0
    %v992 = vadd.f32 %v912, %v991
    %993 = vmatmul.f32.gmra.mxu0 %v435
    %v994 = vpop.f32.mrf.mxu0
    %v995 = vadd.f32 %v912, %v994
    %996 = vmatmul.f32.gmra.mxu0 %v436
    %v997 = vpop.f32.mrf.mxu0
    %v998 = vadd.f32 %v912, %v997
    %999 = vmatmul.f32.gmra.mxu0 %v437
    %v1000 = vpop.f32.mrf.mxu0
    %v1001 = vadd.f32 %v912, %v1000
    %1002 = vmatmul.f32.gmra.mxu0 %v438
    %v1003 = vpop.f32.mrf.mxu0
    %v1004 = vadd.f32 %v912, %v1003
    %1005 = vmatmul.f32.gmra.mxu0 %v439
    %v1006 = vpop.f32.mrf.mxu0
    %v1007 = vadd.f32 %v912, %v1006
    %1008 = vmatmul.f32.gmra.mxu0 %v440
    %v1009 = vpop.f32.mrf.mxu0
    %v1010 = vadd.f32 %v912, %v1009
    %1011 = vmatmul.f32.gmra.mxu0 %v441
    %v1012 = vpop.f32.mrf.mxu0
    %v1013 = vadd.f32 %v912, %v1012
    %1014 = vmatmul.f32.gmra.mxu0 %v442
    %v1015 = vpop.f32.mrf.mxu0
    %v1016 = vadd.f32 %v912, %v1015
    %1017 = vmatmul.f32.gmra.mxu0 %v443
    %v1018 = vpop.f32.mrf.mxu0
    %v1019 = vadd.f32 %v912, %v1018
    %1020 = vmatmul.f32.gmra.mxu0 %v444
    %v1021 = vpop.f32.mrf.mxu0
    %v1022 = vadd.f32 %v912, %v1021
    %1023 = vmatmul.f32.gmra.mxu0 %v445
    %v1024 = vpop.f32.mrf.mxu0
    %v1025 = vadd.f32 %v912, %v1024
    %1026 = vdwg.mxu0
    %v1027 = vmul.f32 %v414, %v583
    %v1028 = vmul.f32 %v415, %v593
    %v1029 = vmul.f32 %v416, %v603
    %v1030 = vmul.f32 %v417, %v613
    %v1031 = vmul.f32 %v418, %v623
    %v1032 = vmul.f32 %v419, %v633
    %v1033 = vmul.f32 %v420, %v643
    %v1034 = vmul.f32 %v421, %v653
    %v1035 = vmul.f32 %v422, %v663
    %v1036 = vmul.f32 %v423, %v673
    %v1037 = vmul.f32 %v424, %v683
    %v1038 = vmul.f32 %v425, %v693
    %v1039 = vmul.f32 %v426, %v703
    %v1040 = vmul.f32 %v427, %v713
    %v1041 = vmul.f32 %v428, %v723
    %v1042 = vmul.f32 %v429, %v733
    %v1043 = vmul.f32 %v430, %v743
    %v1044 = vmul.f32 %v431, %v753
    %v1045 = vmul.f32 %v432, %v763
    %v1046 = vmul.f32 %v433, %v773
    %v1047 = vmul.f32 %v434, %v783
    %v1048 = vmul.f32 %v435, %v793
    %v1049 = vmul.f32 %v436, %v803
    %v1050 = vmul.f32 %v437, %v813
    %v1051 = vmul.f32 %v438, %v823
    %v1052 = vmul.f32 %v439, %v833
    %v1053 = vmul.f32 %v440, %v843
    %v1054 = vmul.f32 %v441, %v853
    %v1055 = vmul.f32 %v442, %v863
    %v1056 = vmul.f32 %v443, %v873
    %v1057 = vmul.f32 %v444, %v883
    %v1058 = vmul.f32 %v445, %v893
    %1059 = vmatpush.msra.mxu0 %v1042
    %1060 = vmatpush.msra.mxu0 %v1041
    %1061 = vmatpush.msra.mxu0 %v1040
    %1062 = vmatpush.msra.mxu0 %v1039
    %1063 = vmatpush.msra.mxu0 %v1038
    %1064 = vmatpush.msra.mxu0 %v1037
    %1065 = vmatpush.msra.mxu0 %v1036
    %1066 = vmatpush.msra.mxu0 %v1035
    %1067 = vmatpush.msra.mxu0 %v1034
    %1068 = vmatpush.msra.mxu0 %v1033
    %1069 = vmatpush.msra.mxu0 %v1032
    %1070 = vmatpush.msra.mxu0 %v1031
    %1071 = vmatpush.msra.mxu0 %v1030
    %1072 = vmatpush.msra.mxu0 %v1029
    %1073 = vmatpush.msra.mxu0 %v1028
    %1074 = vmatpush.msra.mxu0 %v1027
    %1075 = vmatmul.f32.gmra.mxu0 %v350
    %v1076 = vpop.f32.mrf.mxu0
    %v1077 = vadd.f32 0.0, %v1076
    %1078 = vmatmul.f32.gmra.mxu0 %v352
    %v1079 = vpop.f32.mrf.mxu0
    %v1080 = vadd.f32 0.0, %v1079
    %1081 = vmatmul.f32.gmra.mxu0 %v354
    %v1082 = vpop.f32.mrf.mxu0
    %v1083 = vadd.f32 0.0, %v1082
    %1084 = vmatmul.f32.gmra.mxu0 %v356
    %v1085 = vpop.f32.mrf.mxu0
    %v1086 = vadd.f32 0.0, %v1085
    %1087 = vmatmul.f32.gmra.mxu0 %v358
    %v1088 = vpop.f32.mrf.mxu0
    %v1089 = vadd.f32 0.0, %v1088
    %1090 = vmatmul.f32.gmra.mxu0 %v360
    %v1091 = vpop.f32.mrf.mxu0
    %v1092 = vadd.f32 0.0, %v1091
    %1093 = vmatmul.f32.gmra.mxu0 %v362
    %v1094 = vpop.f32.mrf.mxu0
    %v1095 = vadd.f32 0.0, %v1094
    %1096 = vmatmul.f32.gmra.mxu0 %v364
    %v1097 = vpop.f32.mrf.mxu0
    %v1098 = vadd.f32 0.0, %v1097
    %1099 = vmatmul.f32.gmra.mxu0 %v366
    %v1100 = vpop.f32.mrf.mxu0
    %v1101 = vadd.f32 0.0, %v1100
    %1102 = vmatmul.f32.gmra.mxu0 %v368
    %v1103 = vpop.f32.mrf.mxu0
    %v1104 = vadd.f32 0.0, %v1103
    %1105 = vmatmul.f32.gmra.mxu0 %v370
    %v1106 = vpop.f32.mrf.mxu0
    %v1107 = vadd.f32 0.0, %v1106
    %1108 = vmatmul.f32.gmra.mxu0 %v372
    %v1109 = vpop.f32.mrf.mxu0
    %v1110 = vadd.f32 0.0, %v1109
    %1111 = vmatmul.f32.gmra.mxu0 %v374
    %v1112 = vpop.f32.mrf.mxu0
    %v1113 = vadd.f32 0.0, %v1112
    %1114 = vmatmul.f32.gmra.mxu0 %v376
    %v1115 = vpop.f32.mrf.mxu0
    %v1116 = vadd.f32 0.0, %v1115
    %1117 = vmatmul.f32.gmra.mxu0 %v378
    %v1118 = vpop.f32.mrf.mxu0
    %v1119 = vadd.f32 0.0, %v1118
    %1120 = vmatmul.f32.gmra.mxu0 %v380
    %v1121 = vpop.f32.mrf.mxu0
    %v1122 = vadd.f32 0.0, %v1121
    %1123 = vmatmul.f32.gmra.mxu0 %v382
    %v1124 = vpop.f32.mrf.mxu0
    %v1125 = vadd.f32 0.0, %v1124
    %1126 = vmatmul.f32.gmra.mxu0 %v384
    %v1127 = vpop.f32.mrf.mxu0
    %v1128 = vadd.f32 0.0, %v1127
    %1129 = vmatmul.f32.gmra.mxu0 %v386
    %v1130 = vpop.f32.mrf.mxu0
    %v1131 = vadd.f32 0.0, %v1130
    %1132 = vmatmul.f32.gmra.mxu0 %v388
    %v1133 = vpop.f32.mrf.mxu0
    %v1134 = vadd.f32 0.0, %v1133
    %1135 = vmatmul.f32.gmra.mxu0 %v390
    %v1136 = vpop.f32.mrf.mxu0
    %v1137 = vadd.f32 0.0, %v1136
    %1138 = vmatmul.f32.gmra.mxu0 %v392
    %v1139 = vpop.f32.mrf.mxu0
    %v1140 = vadd.f32 0.0, %v1139
    %1141 = vmatmul.f32.gmra.mxu0 %v394
    %v1142 = vpop.f32.mrf.mxu0
    %v1143 = vadd.f32 0.0, %v1142
    %1144 = vmatmul.f32.gmra.mxu0 %v396
    %v1145 = vpop.f32.mrf.mxu0
    %v1146 = vadd.f32 0.0, %v1145
    %1147 = vmatmul.f32.gmra.mxu0 %v398
    %v1148 = vpop.f32.mrf.mxu0
    %v1149 = vadd.f32 0.0, %v1148
    %1150 = vmatmul.f32.gmra.mxu0 %v400
    %v1151 = vpop.f32.mrf.mxu0
    %v1152 = vadd.f32 0.0, %v1151
    %1153 = vmatmul.f32.gmra.mxu0 %v402
    %v1154 = vpop.f32.mrf.mxu0
    %v1155 = vadd.f32 0.0, %v1154
    %1156 = vmatmul.f32.gmra.mxu0 %v404
    %v1157 = vpop.f32.mrf.mxu0
    %v1158 = vadd.f32 0.0, %v1157
    %1159 = vmatmul.f32.gmra.mxu0 %v406
    %v1160 = vpop.f32.mrf.mxu0
    %v1161 = vadd.f32 0.0, %v1160
    %1162 = vmatmul.f32.gmra.mxu0 %v408
    %v1163 = vpop.f32.mrf.mxu0
    %v1164 = vadd.f32 0.0, %v1163
    %1165 = vmatmul.f32.gmra.mxu0 %v410
    %v1166 = vpop.f32.mrf.mxu0
    %v1167 = vadd.f32 0.0, %v1166
    %1168 = vmatmul.f32.gmra.mxu0 %v412
    %v1169 = vpop.f32.mrf.mxu0
    %v1170 = vadd.f32 0.0, %v1169
    %1171 = vdwg.mxu0
    %1172 = vmatpush.msra.mxu0 %v1058
    %1173 = vmatpush.msra.mxu0 %v1057
    %1174 = vmatpush.msra.mxu0 %v1056
    %1175 = vmatpush.msra.mxu0 %v1055
    %1176 = vmatpush.msra.mxu0 %v1054
    %1177 = vmatpush.msra.mxu0 %v1053
    %1178 = vmatpush.msra.mxu0 %v1052
    %1179 = vmatpush.msra.mxu0 %v1051
    %1180 = vmatpush.msra.mxu0 %v1050
    %1181 = vmatpush.msra.mxu0 %v1049
    %1182 = vmatpush.msra.mxu0 %v1048
    %1183 = vmatpush.msra.mxu0 %v1047
    %1184 = vmatpush.msra.mxu0 %v1046
    %1185 = vmatpush.msra.mxu0 %v1045
    %1186 = vmatpush.msra.mxu0 %v1044
    %1187 = vmatpush.msra.mxu0 %v1043
    %1188 = vmatmul.f32.gmra.mxu0 %v351
    %v1189 = vpop.f32.mrf.mxu0
    %v1190 = vadd.f32 %v1077, %v1189
    %1191 = vmatmul.f32.gmra.mxu0 %v353
    %v1192 = vpop.f32.mrf.mxu0
    %v1193 = vadd.f32 %v1080, %v1192
    %1194 = vmatmul.f32.gmra.mxu0 %v355
    %v1195 = vpop.f32.mrf.mxu0
    %v1196 = vadd.f32 %v1083, %v1195
    %1197 = vmatmul.f32.gmra.mxu0 %v357
    %v1198 = vpop.f32.mrf.mxu0
    %v1199 = vadd.f32 %v1086, %v1198
    %1200 = vmatmul.f32.gmra.mxu0 %v359
    %v1201 = vpop.f32.mrf.mxu0
    %v1202 = vadd.f32 %v1089, %v1201
    %1203 = vmatmul.f32.gmra.mxu0 %v361
    %v1204 = vpop.f32.mrf.mxu0
    %v1205 = vadd.f32 %v1092, %v1204
    %1206 = vmatmul.f32.gmra.mxu0 %v363
    %v1207 = vpop.f32.mrf.mxu0
    %v1208 = vadd.f32 %v1095, %v1207
    %1209 = vmatmul.f32.gmra.mxu0 %v365
    %v1210 = vpop.f32.mrf.mxu0
    %v1211 = vadd.f32 %v1098, %v1210
    %1212 = vmatmul.f32.gmra.mxu0 %v367
    %v1213 = vpop.f32.mrf.mxu0
    %v1214 = vadd.f32 %v1101, %v1213
    %1215 = vmatmul.f32.gmra.mxu0 %v369
    %v1216 = vpop.f32.mrf.mxu0
    %v1217 = vadd.f32 %v1104, %v1216
    %1218 = vmatmul.f32.gmra.mxu0 %v371
    %v1219 = vpop.f32.mrf.mxu0
    %v1220 = vadd.f32 %v1107, %v1219
    %1221 = vmatmul.f32.gmra.mxu0 %v373
    %v1222 = vpop.f32.mrf.mxu0
    %v1223 = vadd.f32 %v1110, %v1222
    %1224 = vmatmul.f32.gmra.mxu0 %v375
    %v1225 = vpop.f32.mrf.mxu0
    %v1226 = vadd.f32 %v1113, %v1225
    %1227 = vmatmul.f32.gmra.mxu0 %v377
    %v1228 = vpop.f32.mrf.mxu0
    %v1229 = vadd.f32 %v1116, %v1228
    %1230 = vmatmul.f32.gmra.mxu0 %v379
    %v1231 = vpop.f32.mrf.mxu0
    %v1232 = vadd.f32 %v1119, %v1231
    %1233 = vmatmul.f32.gmra.mxu0 %v381
    %v1234 = vpop.f32.mrf.mxu0
    %v1235 = vadd.f32 %v1122, %v1234
    %1236 = vmatmul.f32.gmra.mxu0 %v383
    %v1237 = vpop.f32.mrf.mxu0
    %v1238 = vadd.f32 %v1125, %v1237
    %1239 = vmatmul.f32.gmra.mxu0 %v385
    %v1240 = vpop.f32.mrf.mxu0
    %v1241 = vadd.f32 %v1128, %v1240
    %1242 = vmatmul.f32.gmra.mxu0 %v387
    %v1243 = vpop.f32.mrf.mxu0
    %v1244 = vadd.f32 %v1131, %v1243
    %1245 = vmatmul.f32.gmra.mxu0 %v389
    %v1246 = vpop.f32.mrf.mxu0
    %v1247 = vadd.f32 %v1134, %v1246
    %1248 = vmatmul.f32.gmra.mxu0 %v391
    %v1249 = vpop.f32.mrf.mxu0
    %v1250 = vadd.f32 %v1137, %v1249
    %1251 = vmatmul.f32.gmra.mxu0 %v393
    %v1252 = vpop.f32.mrf.mxu0
    %v1253 = vadd.f32 %v1140, %v1252
    %1254 = vmatmul.f32.gmra.mxu0 %v395
    %v1255 = vpop.f32.mrf.mxu0
    %v1256 = vadd.f32 %v1143, %v1255
    %1257 = vmatmul.f32.gmra.mxu0 %v397
    %v1258 = vpop.f32.mrf.mxu0
    %v1259 = vadd.f32 %v1146, %v1258
    %1260 = vmatmul.f32.gmra.mxu0 %v399
    %v1261 = vpop.f32.mrf.mxu0
    %v1262 = vadd.f32 %v1149, %v1261
    %1263 = vmatmul.f32.gmra.mxu0 %v401
    %v1264 = vpop.f32.mrf.mxu0
    %v1265 = vadd.f32 %v1152, %v1264
    %1266 = vmatmul.f32.gmra.mxu0 %v403
    %v1267 = vpop.f32.mrf.mxu0
    %v1268 = vadd.f32 %v1155, %v1267
    %1269 = vmatmul.f32.gmra.mxu0 %v405
    %v1270 = vpop.f32.mrf.mxu0
    %v1271 = vadd.f32 %v1158, %v1270
    %1272 = vmatmul.f32.gmra.mxu0 %v407
    %v1273 = vpop.f32.mrf.mxu0
    %v1274 = vadd.f32 %v1161, %v1273
    %1275 = vmatmul.f32.gmra.mxu0 %v409
    %v1276 = vpop.f32.mrf.mxu0
    %v1277 = vadd.f32 %v1164, %v1276
    %1278 = vmatmul.f32.gmra.mxu0 %v411
    %v1279 = vpop.f32.mrf.mxu0
    %v1280 = vadd.f32 %v1167, %v1279
    %1281 = vmatmul.f32.gmra.mxu0 %v413
    %v1282 = vpop.f32.mrf.mxu0
    %v1283 = vadd.f32 %v1170, %v1282
    %1284 = vdwg.mxu0
    %v1285 = vmul.f32 %v1190, %v583
    %v1286 = vmul.f32 %v1193, %v593
    %v1287 = vmul.f32 %v1196, %v603
    %v1288 = vmul.f32 %v1199, %v613
    %v1289 = vmul.f32 %v1202, %v623
    %v1290 = vmul.f32 %v1205, %v633
    %v1291 = vmul.f32 %v1208, %v643
    %v1292 = vmul.f32 %v1211, %v653
    %v1293 = vmul.f32 %v1214, %v663
    %v1294 = vmul.f32 %v1217, %v673
    %v1295 = vmul.f32 %v1220, %v683
    %v1296 = vmul.f32 %v1223, %v693
    %v1297 = vmul.f32 %v1226, %v703
    %v1298 = vmul.f32 %v1229, %v713
    %v1299 = vmul.f32 %v1232, %v723
    %v1300 = vmul.f32 %v1235, %v733
    %v1301 = vmul.f32 %v1238, %v743
    %v1302 = vmul.f32 %v1241, %v753
    %v1303 = vmul.f32 %v1244, %v763
    %v1304 = vmul.f32 %v1247, %v773
    %v1305 = vmul.f32 %v1250, %v783
    %v1306 = vmul.f32 %v1253, %v793
    %v1307 = vmul.f32 %v1256, %v803
    %v1308 = vmul.f32 %v1259, %v813
    %v1309 = vmul.f32 %v1262, %v823
    %v1310 = vmul.f32 %v1265, %v833
    %v1311 = vmul.f32 %v1268, %v843
    %v1312 = vmul.f32 %v1271, %v853
    %v1313 = vmul.f32 %v1274, %v863
    %v1314 = vmul.f32 %v1277, %v873
    %v1315 = vmul.f32 %v1280, %v883
    %v1316 = vmul.f32 %v1283, %v893
    %v1317 = vld [vmem:[%s2 + $0x1] sm:$0x1]
    %v1318 = vperm.slane %v1317, 0
    %v1319 = vmul.f32 %v1285, %v1318
    %v1320 = vmul.f32 %v1286, %v1318
    %v1321 = vmul.f32 %v1287, %v1318
    %v1322 = vmul.f32 %v1288, %v1318
    %v1323 = vmul.f32 %v1289, %v1318
    %v1324 = vmul.f32 %v1290, %v1318
    %v1325 = vmul.f32 %v1291, %v1318
    %v1326 = vmul.f32 %v1292, %v1318
    %v1327 = vmul.f32 %v1293, %v1318
    %v1328 = vmul.f32 %v1294, %v1318
    %v1329 = vmul.f32 %v1295, %v1318
    %v1330 = vmul.f32 %v1296, %v1318
    %v1331 = vmul.f32 %v1297, %v1318
    %v1332 = vmul.f32 %v1298, %v1318
    %v1333 = vmul.f32 %v1299, %v1318
    %v1334 = vmul.f32 %v1300, %v1318
    %v1335 = vmul.f32 %v1301, %v1318
    %v1336 = vmul.f32 %v1302, %v1318
    %v1337 = vmul.f32 %v1303, %v1318
    %v1338 = vmul.f32 %v1304, %v1318
    %v1339 = vmul.f32 %v1305, %v1318
    %v1340 = vmul.f32 %v1306, %v1318
    %v1341 = vmul.f32 %v1307, %v1318
    %v1342 = vmul.f32 %v1308, %v1318
    %v1343 = vmul.f32 %v1309, %v1318
    %v1344 = vmul.f32 %v1310, %v1318
    %v1345 = vmul.f32 %v1311, %v1318
    %v1346 = vmul.f32 %v1312, %v1318
    %v1347 = vmul.f32 %v1313, %v1318
    %v1348 = vmul.f32 %v1314, %v1318
    %v1349 = vmul.f32 %v1315, %v1318
    %v1350 = vmul.f32 %v1316, %v1318
    %v1351 = vsub.f32 %v414, %v1319
    %v1352 = vsub.f32 %v415, %v1320
    %v1353 = vsub.f32 %v416, %v1321
    %v1354 = vsub.f32 %v417, %v1322
    %v1355 = vsub.f32 %v418, %v1323
    %v1356 = vsub.f32 %v419, %v1324
    %v1357 = vsub.f32 %v420, %v1325
    %v1358 = vsub.f32 %v421, %v1326
    %v1359 = vsub.f32 %v422, %v1327
    %v1360 = vsub.f32 %v423, %v1328
    %v1361 = vsub.f32 %v424, %v1329
    %v1362 = vsub.f32 %v425, %v1330
    %v1363 = vsub.f32 %v426, %v1331
    %v1364 = vsub.f32 %v427, %v1332
    %v1365 = vsub.f32 %v428, %v1333
    %v1366 = vsub.f32 %v429, %v1334
    %v1367 = vsub.f32 %v430, %v1335
    %v1368 = vsub.f32 %v431, %v1336
    %v1369 = vsub.f32 %v432, %v1337
    %v1370 = vsub.f32 %v433, %v1338
    %v1371 = vsub.f32 %v434, %v1339
    %v1372 = vsub.f32 %v435, %v1340
    %v1373 = vsub.f32 %v436, %v1341
    %v1374 = vsub.f32 %v437, %v1342
    %v1375 = vsub.f32 %v438, %v1343
    %v1376 = vsub.f32 %v439, %v1344
    %v1377 = vsub.f32 %v440, %v1345
    %v1378 = vsub.f32 %v441, %v1346
    %v1379 = vsub.f32 %v442, %v1347
    %v1380 = vsub.f32 %v443, %v1348
    %v1381 = vsub.f32 %v444, %v1349
    %v1382 = vsub.f32 %v445, %v1350
    %v1383 = vmul.f32 %v1351, 0.3
    %v1384 = vmul.f32 %v1352, 0.3
    %v1385 = vmul.f32 %v1353, 0.3
    %v1386 = vmul.f32 %v1354, 0.3
    %v1387 = vmul.f32 %v1355, 0.3
    %v1388 = vmul.f32 %v1356, 0.3
    %v1389 = vmul.f32 %v1357, 0.3
    %v1390 = vmul.f32 %v1358, 0.3
    %v1391 = vmul.f32 %v1359, 0.3
    %v1392 = vmul.f32 %v1360, 0.3
    %v1393 = vmul.f32 %v1361, 0.3
    %v1394 = vmul.f32 %v1362, 0.3
    %v1395 = vmul.f32 %v1363, 0.3
    %v1396 = vmul.f32 %v1364, 0.3
    %v1397 = vmul.f32 %v1365, 0.3
    %v1398 = vmul.f32 %v1366, 0.3
    %v1399 = vmul.f32 %v1367, 0.3
    %v1400 = vmul.f32 %v1368, 0.3
    %v1401 = vmul.f32 %v1369, 0.3
    %v1402 = vmul.f32 %v1370, 0.3
    %v1403 = vmul.f32 %v1371, 0.3
    %v1404 = vmul.f32 %v1372, 0.3
    %v1405 = vmul.f32 %v1373, 0.3
    %v1406 = vmul.f32 %v1374, 0.3
    %v1407 = vmul.f32 %v1375, 0.3
    %v1408 = vmul.f32 %v1376, 0.3
    %v1409 = vmul.f32 %v1377, 0.3
    %v1410 = vmul.f32 %v1378, 0.3
    %v1411 = vmul.f32 %v1379, 0.3
    %v1412 = vmul.f32 %v1380, 0.3
    %v1413 = vmul.f32 %v1381, 0.3
    %v1414 = vmul.f32 %v1382, 0.3
    %v1415 = vadd.f32 %v932, %v1383
    %v1416 = vadd.f32 %v935, %v1384
    %v1417 = vadd.f32 %v938, %v1385
    %v1418 = vadd.f32 %v941, %v1386
    %v1419 = vadd.f32 %v944, %v1387
    %v1420 = vadd.f32 %v947, %v1388
    %v1421 = vadd.f32 %v950, %v1389
    %v1422 = vadd.f32 %v953, %v1390
    %v1423 = vadd.f32 %v956, %v1391
    %v1424 = vadd.f32 %v959, %v1392
    %v1425 = vadd.f32 %v962, %v1393
    %v1426 = vadd.f32 %v965, %v1394
    %v1427 = vadd.f32 %v968, %v1395
    %v1428 = vadd.f32 %v971, %v1396
    %v1429 = vadd.f32 %v974, %v1397
    %v1430 = vadd.f32 %v977, %v1398
    %v1431 = vadd.f32 %v980, %v1399
    %v1432 = vadd.f32 %v983, %v1400
    %v1433 = vadd.f32 %v986, %v1401
    %v1434 = vadd.f32 %v989, %v1402
    %v1435 = vadd.f32 %v992, %v1403
    %v1436 = vadd.f32 %v995, %v1404
    %v1437 = vadd.f32 %v998, %v1405
    %v1438 = vadd.f32 %v1001, %v1406
    %v1439 = vadd.f32 %v1004, %v1407
    %v1440 = vadd.f32 %v1007, %v1408
    %v1441 = vadd.f32 %v1010, %v1409
    %v1442 = vadd.f32 %v1013, %v1410
    %v1443 = vadd.f32 %v1016, %v1411
    %v1444 = vadd.f32 %v1019, %v1412
    %v1445 = vadd.f32 %v1022, %v1413
    %v1446 = vadd.f32 %v1025, %v1414
    %v1447 = vmul.f32 %v1351, %v583
    %v1448 = vmul.f32 %v1352, %v593
    %v1449 = vmul.f32 %v1353, %v603
    %v1450 = vmul.f32 %v1354, %v613
    %v1451 = vmul.f32 %v1355, %v623
    %v1452 = vmul.f32 %v1356, %v633
    %v1453 = vmul.f32 %v1357, %v643
    %v1454 = vmul.f32 %v1358, %v653
    %v1455 = vmul.f32 %v1359, %v663
    %v1456 = vmul.f32 %v1360, %v673
    %v1457 = vmul.f32 %v1361, %v683
    %v1458 = vmul.f32 %v1362, %v693
    %v1459 = vmul.f32 %v1363, %v703
    %v1460 = vmul.f32 %v1364, %v713
    %v1461 = vmul.f32 %v1365, %v723
    %v1462 = vmul.f32 %v1366, %v733
    %v1463 = vmul.f32 %v1367, %v743
    %v1464 = vmul.f32 %v1368, %v753
    %v1465 = vmul.f32 %v1369, %v763
    %v1466 = vmul.f32 %v1370, %v773
    %v1467 = vmul.f32 %v1371, %v783
    %v1468 = vmul.f32 %v1372, %v793
    %v1469 = vmul.f32 %v1373, %v803
    %v1470 = vmul.f32 %v1374, %v813
    %v1471 = vmul.f32 %v1375, %v823
    %v1472 = vmul.f32 %v1376, %v833
    %v1473 = vmul.f32 %v1377, %v843
    %v1474 = vmul.f32 %v1378, %v853
    %v1475 = vmul.f32 %v1379, %v863
    %v1476 = vmul.f32 %v1380, %v873
    %v1477 = vmul.f32 %v1381, %v883
    %v1478 = vmul.f32 %v1382, %v893
    %1479 = vmatpush.msra.mxu0 %v1462
    %1480 = vmatpush.msra.mxu0 %v1461
    %1481 = vmatpush.msra.mxu0 %v1460
    %1482 = vmatpush.msra.mxu0 %v1459
    %1483 = vmatpush.msra.mxu0 %v1458
    %1484 = vmatpush.msra.mxu0 %v1457
    %1485 = vmatpush.msra.mxu0 %v1456
    %1486 = vmatpush.msra.mxu0 %v1455
    %1487 = vmatpush.msra.mxu0 %v1454
    %1488 = vmatpush.msra.mxu0 %v1453
    %1489 = vmatpush.msra.mxu0 %v1452
    %1490 = vmatpush.msra.mxu0 %v1451
    %1491 = vmatpush.msra.mxu0 %v1450
    %1492 = vmatpush.msra.mxu0 %v1449
    %1493 = vmatpush.msra.mxu0 %v1448
    %1494 = vmatpush.msra.mxu0 %v1447
    %1495 = vmatmul.f32.gmra.mxu0 %v350
    %v1496 = vpop.f32.mrf.mxu0
    %v1497 = vadd.f32 0.0, %v1496
    %1498 = vmatmul.f32.gmra.mxu0 %v352
    %v1499 = vpop.f32.mrf.mxu0
    %v1500 = vadd.f32 0.0, %v1499
    %1501 = vmatmul.f32.gmra.mxu0 %v354
    %v1502 = vpop.f32.mrf.mxu0
    %v1503 = vadd.f32 0.0, %v1502
    %1504 = vmatmul.f32.gmra.mxu0 %v356
    %v1505 = vpop.f32.mrf.mxu0
    %v1506 = vadd.f32 0.0, %v1505
    %1507 = vmatmul.f32.gmra.mxu0 %v358
    %v1508 = vpop.f32.mrf.mxu0
    %v1509 = vadd.f32 0.0, %v1508
    %1510 = vmatmul.f32.gmra.mxu0 %v360
    %v1511 = vpop.f32.mrf.mxu0
    %v1512 = vadd.f32 0.0, %v1511
    %1513 = vmatmul.f32.gmra.mxu0 %v362
    %v1514 = vpop.f32.mrf.mxu0
    %v1515 = vadd.f32 0.0, %v1514
    %1516 = vmatmul.f32.gmra.mxu0 %v364
    %v1517 = vpop.f32.mrf.mxu0
    %v1518 = vadd.f32 0.0, %v1517
    %1519 = vmatmul.f32.gmra.mxu0 %v366
    %v1520 = vpop.f32.mrf.mxu0
    %v1521 = vadd.f32 0.0, %v1520
    %1522 = vmatmul.f32.gmra.mxu0 %v368
    %v1523 = vpop.f32.mrf.mxu0
    %v1524 = vadd.f32 0.0, %v1523
    %1525 = vmatmul.f32.gmra.mxu0 %v370
    %v1526 = vpop.f32.mrf.mxu0
    %v1527 = vadd.f32 0.0, %v1526
    %1528 = vmatmul.f32.gmra.mxu0 %v372
    %v1529 = vpop.f32.mrf.mxu0
    %v1530 = vadd.f32 0.0, %v1529
    %1531 = vmatmul.f32.gmra.mxu0 %v374
    %v1532 = vpop.f32.mrf.mxu0
    %v1533 = vadd.f32 0.0, %v1532
    %1534 = vmatmul.f32.gmra.mxu0 %v376
    %v1535 = vpop.f32.mrf.mxu0
    %v1536 = vadd.f32 0.0, %v1535
    %1537 = vmatmul.f32.gmra.mxu0 %v378
    %v1538 = vpop.f32.mrf.mxu0
    %v1539 = vadd.f32 0.0, %v1538
    %1540 = vmatmul.f32.gmra.mxu0 %v380
    %v1541 = vpop.f32.mrf.mxu0
    %v1542 = vadd.f32 0.0, %v1541
    %1543 = vmatmul.f32.gmra.mxu0 %v382
    %v1544 = vpop.f32.mrf.mxu0
    %v1545 = vadd.f32 0.0, %v1544
    %1546 = vmatmul.f32.gmra.mxu0 %v384
    %v1547 = vpop.f32.mrf.mxu0
    %v1548 = vadd.f32 0.0, %v1547
    %1549 = vmatmul.f32.gmra.mxu0 %v386
    %v1550 = vpop.f32.mrf.mxu0
    %v1551 = vadd.f32 0.0, %v1550
    %1552 = vmatmul.f32.gmra.mxu0 %v388
    %v1553 = vpop.f32.mrf.mxu0
    %v1554 = vadd.f32 0.0, %v1553
    %1555 = vmatmul.f32.gmra.mxu0 %v390
    %v1556 = vpop.f32.mrf.mxu0
    %v1557 = vadd.f32 0.0, %v1556
    %1558 = vmatmul.f32.gmra.mxu0 %v392
    %v1559 = vpop.f32.mrf.mxu0
    %v1560 = vadd.f32 0.0, %v1559
    %1561 = vmatmul.f32.gmra.mxu0 %v394
    %v1562 = vpop.f32.mrf.mxu0
    %v1563 = vadd.f32 0.0, %v1562
    %1564 = vmatmul.f32.gmra.mxu0 %v396
    %v1565 = vpop.f32.mrf.mxu0
    %v1566 = vadd.f32 0.0, %v1565
    %1567 = vmatmul.f32.gmra.mxu0 %v398
    %v1568 = vpop.f32.mrf.mxu0
    %v1569 = vadd.f32 0.0, %v1568
    %1570 = vmatmul.f32.gmra.mxu0 %v400
    %v1571 = vpop.f32.mrf.mxu0
    %v1572 = vadd.f32 0.0, %v1571
    %1573 = vmatmul.f32.gmra.mxu0 %v402
    %v1574 = vpop.f32.mrf.mxu0
    %v1575 = vadd.f32 0.0, %v1574
    %1576 = vmatmul.f32.gmra.mxu0 %v404
    %v1577 = vpop.f32.mrf.mxu0
    %v1578 = vadd.f32 0.0, %v1577
    %1579 = vmatmul.f32.gmra.mxu0 %v406
    %v1580 = vpop.f32.mrf.mxu0
    %v1581 = vadd.f32 0.0, %v1580
    %1582 = vmatmul.f32.gmra.mxu0 %v408
    %v1583 = vpop.f32.mrf.mxu0
    %v1584 = vadd.f32 0.0, %v1583
    %1585 = vmatmul.f32.gmra.mxu0 %v410
    %v1586 = vpop.f32.mrf.mxu0
    %v1587 = vadd.f32 0.0, %v1586
    %1588 = vmatmul.f32.gmra.mxu0 %v412
    %v1589 = vpop.f32.mrf.mxu0
    %v1590 = vadd.f32 0.0, %v1589
    %1591 = vdwg.mxu0
    %1592 = vmatpush.msra.mxu0 %v1478
    %1593 = vmatpush.msra.mxu0 %v1477
    %1594 = vmatpush.msra.mxu0 %v1476
    %1595 = vmatpush.msra.mxu0 %v1475
    %1596 = vmatpush.msra.mxu0 %v1474
    %1597 = vmatpush.msra.mxu0 %v1473
    %1598 = vmatpush.msra.mxu0 %v1472
    %1599 = vmatpush.msra.mxu0 %v1471
    %1600 = vmatpush.msra.mxu0 %v1470
    %1601 = vmatpush.msra.mxu0 %v1469
    %1602 = vmatpush.msra.mxu0 %v1468
    %1603 = vmatpush.msra.mxu0 %v1467
    %1604 = vmatpush.msra.mxu0 %v1466
    %1605 = vmatpush.msra.mxu0 %v1465
    %1606 = vmatpush.msra.mxu0 %v1464
    %1607 = vmatpush.msra.mxu0 %v1463
    %1608 = vmatmul.f32.gmra.mxu0 %v351
    %v1609 = vpop.f32.mrf.mxu0
    %v1610 = vadd.f32 %v1497, %v1609
    %1611 = vmatmul.f32.gmra.mxu0 %v353
    %v1612 = vpop.f32.mrf.mxu0
    %v1613 = vadd.f32 %v1500, %v1612
    %1614 = vmatmul.f32.gmra.mxu0 %v355
    %v1615 = vpop.f32.mrf.mxu0
    %v1616 = vadd.f32 %v1503, %v1615
    %1617 = vmatmul.f32.gmra.mxu0 %v357
    %v1618 = vpop.f32.mrf.mxu0
    %v1619 = vadd.f32 %v1506, %v1618
    %1620 = vmatmul.f32.gmra.mxu0 %v359
    %v1621 = vpop.f32.mrf.mxu0
    %v1622 = vadd.f32 %v1509, %v1621
    %1623 = vmatmul.f32.gmra.mxu0 %v361
    %v1624 = vpop.f32.mrf.mxu0
    %v1625 = vadd.f32 %v1512, %v1624
    %1626 = vmatmul.f32.gmra.mxu0 %v363
    %v1627 = vpop.f32.mrf.mxu0
    %v1628 = vadd.f32 %v1515, %v1627
    %1629 = vmatmul.f32.gmra.mxu0 %v365
    %v1630 = vpop.f32.mrf.mxu0
    %v1631 = vadd.f32 %v1518, %v1630
    %1632 = vmatmul.f32.gmra.mxu0 %v367
    %v1633 = vpop.f32.mrf.mxu0
    %v1634 = vadd.f32 %v1521, %v1633
    %1635 = vmatmul.f32.gmra.mxu0 %v369
    %v1636 = vpop.f32.mrf.mxu0
    %v1637 = vadd.f32 %v1524, %v1636
    %1638 = vmatmul.f32.gmra.mxu0 %v371
    %v1639 = vpop.f32.mrf.mxu0
    %v1640 = vadd.f32 %v1527, %v1639
    %1641 = vmatmul.f32.gmra.mxu0 %v373
    %v1642 = vpop.f32.mrf.mxu0
    %v1643 = vadd.f32 %v1530, %v1642
    %1644 = vmatmul.f32.gmra.mxu0 %v375
    %v1645 = vpop.f32.mrf.mxu0
    %v1646 = vadd.f32 %v1533, %v1645
    %1647 = vmatmul.f32.gmra.mxu0 %v377
    %v1648 = vpop.f32.mrf.mxu0
    %v1649 = vadd.f32 %v1536, %v1648
    %1650 = vmatmul.f32.gmra.mxu0 %v379
    %v1651 = vpop.f32.mrf.mxu0
    %v1652 = vadd.f32 %v1539, %v1651
    %1653 = vmatmul.f32.gmra.mxu0 %v381
    %v1654 = vpop.f32.mrf.mxu0
    %v1655 = vadd.f32 %v1542, %v1654
    %1656 = vmatmul.f32.gmra.mxu0 %v383
    %v1657 = vpop.f32.mrf.mxu0
    %v1658 = vadd.f32 %v1545, %v1657
    %1659 = vmatmul.f32.gmra.mxu0 %v385
    %v1660 = vpop.f32.mrf.mxu0
    %v1661 = vadd.f32 %v1548, %v1660
    %1662 = vmatmul.f32.gmra.mxu0 %v387
    %v1663 = vpop.f32.mrf.mxu0
    %v1664 = vadd.f32 %v1551, %v1663
    %1665 = vmatmul.f32.gmra.mxu0 %v389
    %v1666 = vpop.f32.mrf.mxu0
    %v1667 = vadd.f32 %v1554, %v1666
    %1668 = vmatmul.f32.gmra.mxu0 %v391
    %v1669 = vpop.f32.mrf.mxu0
    %v1670 = vadd.f32 %v1557, %v1669
    %1671 = vmatmul.f32.gmra.mxu0 %v393
    %v1672 = vpop.f32.mrf.mxu0
    %v1673 = vadd.f32 %v1560, %v1672
    %1674 = vmatmul.f32.gmra.mxu0 %v395
    %v1675 = vpop.f32.mrf.mxu0
    %v1676 = vadd.f32 %v1563, %v1675
    %1677 = vmatmul.f32.gmra.mxu0 %v397
    %v1678 = vpop.f32.mrf.mxu0
    %v1679 = vadd.f32 %v1566, %v1678
    %1680 = vmatmul.f32.gmra.mxu0 %v399
    %v1681 = vpop.f32.mrf.mxu0
    %v1682 = vadd.f32 %v1569, %v1681
    %1683 = vmatmul.f32.gmra.mxu0 %v401
    %v1684 = vpop.f32.mrf.mxu0
    %v1685 = vadd.f32 %v1572, %v1684
    %1686 = vmatmul.f32.gmra.mxu0 %v403
    %v1687 = vpop.f32.mrf.mxu0
    %v1688 = vadd.f32 %v1575, %v1687
    %1689 = vmatmul.f32.gmra.mxu0 %v405
    %v1690 = vpop.f32.mrf.mxu0
    %v1691 = vadd.f32 %v1578, %v1690
    %1692 = vmatmul.f32.gmra.mxu0 %v407
    %v1693 = vpop.f32.mrf.mxu0
    %v1694 = vadd.f32 %v1581, %v1693
    %1695 = vmatmul.f32.gmra.mxu0 %v409
    %v1696 = vpop.f32.mrf.mxu0
    %v1697 = vadd.f32 %v1584, %v1696
    %1698 = vmatmul.f32.gmra.mxu0 %v411
    %v1699 = vpop.f32.mrf.mxu0
    %v1700 = vadd.f32 %v1587, %v1699
    %1701 = vmatmul.f32.gmra.mxu0 %v413
    %v1702 = vpop.f32.mrf.mxu0
    %v1703 = vadd.f32 %v1590, %v1702
    %1704 = vdwg.mxu0
    %v1705 = vmul.f32 %v1610, %v583
    %v1706 = vmul.f32 %v1613, %v593
    %v1707 = vmul.f32 %v1616, %v603
    %v1708 = vmul.f32 %v1619, %v613
    %v1709 = vmul.f32 %v1622, %v623
    %v1710 = vmul.f32 %v1625, %v633
    %v1711 = vmul.f32 %v1628, %v643
    %v1712 = vmul.f32 %v1631, %v653
    %v1713 = vmul.f32 %v1634, %v663
    %v1714 = vmul.f32 %v1637, %v673
    %v1715 = vmul.f32 %v1640, %v683
    %v1716 = vmul.f32 %v1643, %v693
    %v1717 = vmul.f32 %v1646, %v703
    %v1718 = vmul.f32 %v1649, %v713
    %v1719 = vmul.f32 %v1652, %v723
    %v1720 = vmul.f32 %v1655, %v733
    %v1721 = vmul.f32 %v1658, %v743
    %v1722 = vmul.f32 %v1661, %v753
    %v1723 = vmul.f32 %v1664, %v763
    %v1724 = vmul.f32 %v1667, %v773
    %v1725 = vmul.f32 %v1670, %v783
    %v1726 = vmul.f32 %v1673, %v793
    %v1727 = vmul.f32 %v1676, %v803
    %v1728 = vmul.f32 %v1679, %v813
    %v1729 = vmul.f32 %v1682, %v823
    %v1730 = vmul.f32 %v1685, %v833
    %v1731 = vmul.f32 %v1688, %v843
    %v1732 = vmul.f32 %v1691, %v853
    %v1733 = vmul.f32 %v1694, %v863
    %v1734 = vmul.f32 %v1697, %v873
    %v1735 = vmul.f32 %v1700, %v883
    %v1736 = vmul.f32 %v1703, %v893
    %v1737 = vld [vmem:[%s2 + $0x2] sm:$0x1]
    %v1738 = vperm.slane %v1737, 0
    %v1739 = vmul.f32 %v1705, %v1738
    %v1740 = vmul.f32 %v1706, %v1738
    %v1741 = vmul.f32 %v1707, %v1738
    %v1742 = vmul.f32 %v1708, %v1738
    %v1743 = vmul.f32 %v1709, %v1738
    %v1744 = vmul.f32 %v1710, %v1738
    %v1745 = vmul.f32 %v1711, %v1738
    %v1746 = vmul.f32 %v1712, %v1738
    %v1747 = vmul.f32 %v1713, %v1738
    %v1748 = vmul.f32 %v1714, %v1738
    %v1749 = vmul.f32 %v1715, %v1738
    %v1750 = vmul.f32 %v1716, %v1738
    %v1751 = vmul.f32 %v1717, %v1738
    %v1752 = vmul.f32 %v1718, %v1738
    %v1753 = vmul.f32 %v1719, %v1738
    %v1754 = vmul.f32 %v1720, %v1738
    %v1755 = vmul.f32 %v1721, %v1738
    %v1756 = vmul.f32 %v1722, %v1738
    %v1757 = vmul.f32 %v1723, %v1738
    %v1758 = vmul.f32 %v1724, %v1738
    %v1759 = vmul.f32 %v1725, %v1738
    %v1760 = vmul.f32 %v1726, %v1738
    %v1761 = vmul.f32 %v1727, %v1738
    %v1762 = vmul.f32 %v1728, %v1738
    %v1763 = vmul.f32 %v1729, %v1738
    %v1764 = vmul.f32 %v1730, %v1738
    %v1765 = vmul.f32 %v1731, %v1738
    %v1766 = vmul.f32 %v1732, %v1738
    %v1767 = vmul.f32 %v1733, %v1738
    %v1768 = vmul.f32 %v1734, %v1738
    %v1769 = vmul.f32 %v1735, %v1738
    %v1770 = vmul.f32 %v1736, %v1738
    %v1771 = vsub.f32 %v1351, %v1739
    %v1772 = vsub.f32 %v1352, %v1740
    %v1773 = vsub.f32 %v1353, %v1741
    %v1774 = vsub.f32 %v1354, %v1742
    %v1775 = vsub.f32 %v1355, %v1743
    %v1776 = vsub.f32 %v1356, %v1744
    %v1777 = vsub.f32 %v1357, %v1745
    %v1778 = vsub.f32 %v1358, %v1746
    %v1779 = vsub.f32 %v1359, %v1747
    %v1780 = vsub.f32 %v1360, %v1748
    %v1781 = vsub.f32 %v1361, %v1749
    %v1782 = vsub.f32 %v1362, %v1750
    %v1783 = vsub.f32 %v1363, %v1751
    %v1784 = vsub.f32 %v1364, %v1752
    %v1785 = vsub.f32 %v1365, %v1753
    %v1786 = vsub.f32 %v1366, %v1754
    %v1787 = vsub.f32 %v1367, %v1755
    %v1788 = vsub.f32 %v1368, %v1756
    %v1789 = vsub.f32 %v1369, %v1757
    %v1790 = vsub.f32 %v1370, %v1758
    %v1791 = vsub.f32 %v1371, %v1759
    %v1792 = vsub.f32 %v1372, %v1760
    %v1793 = vsub.f32 %v1373, %v1761
    %v1794 = vsub.f32 %v1374, %v1762
    %v1795 = vsub.f32 %v1375, %v1763
    %v1796 = vsub.f32 %v1376, %v1764
    %v1797 = vsub.f32 %v1377, %v1765
    %v1798 = vsub.f32 %v1378, %v1766
    %v1799 = vsub.f32 %v1379, %v1767
    %v1800 = vsub.f32 %v1380, %v1768
    %v1801 = vsub.f32 %v1381, %v1769
    %v1802 = vsub.f32 %v1382, %v1770
    %v1803 = vmul.f32 %v1771, 0.2
    %v1804 = vmul.f32 %v1772, 0.2
    %v1805 = vmul.f32 %v1773, 0.2
    %v1806 = vmul.f32 %v1774, 0.2
    %v1807 = vmul.f32 %v1775, 0.2
    %v1808 = vmul.f32 %v1776, 0.2
    %v1809 = vmul.f32 %v1777, 0.2
    %v1810 = vmul.f32 %v1778, 0.2
    %v1811 = vmul.f32 %v1779, 0.2
    %v1812 = vmul.f32 %v1780, 0.2
    %v1813 = vmul.f32 %v1781, 0.2
    %v1814 = vmul.f32 %v1782, 0.2
    %v1815 = vmul.f32 %v1783, 0.2
    %v1816 = vmul.f32 %v1784, 0.2
    %v1817 = vmul.f32 %v1785, 0.2
    %v1818 = vmul.f32 %v1786, 0.2
    %v1819 = vmul.f32 %v1787, 0.2
    %v1820 = vmul.f32 %v1788, 0.2
    %v1821 = vmul.f32 %v1789, 0.2
    %v1822 = vmul.f32 %v1790, 0.2
    %v1823 = vmul.f32 %v1791, 0.2
    %v1824 = vmul.f32 %v1792, 0.2
    %v1825 = vmul.f32 %v1793, 0.2
    %v1826 = vmul.f32 %v1794, 0.2
    %v1827 = vmul.f32 %v1795, 0.2
    %v1828 = vmul.f32 %v1796, 0.2
    %v1829 = vmul.f32 %v1797, 0.2
    %v1830 = vmul.f32 %v1798, 0.2
    %v1831 = vmul.f32 %v1799, 0.2
    %v1832 = vmul.f32 %v1800, 0.2
    %v1833 = vmul.f32 %v1801, 0.2
    %v1834 = vmul.f32 %v1802, 0.2
    %v1835 = vadd.f32 %v1415, %v1803
    %v1836 = vadd.f32 %v1416, %v1804
    %v1837 = vadd.f32 %v1417, %v1805
    %v1838 = vadd.f32 %v1418, %v1806
    %v1839 = vadd.f32 %v1419, %v1807
    %v1840 = vadd.f32 %v1420, %v1808
    %v1841 = vadd.f32 %v1421, %v1809
    %v1842 = vadd.f32 %v1422, %v1810
    %v1843 = vadd.f32 %v1423, %v1811
    %v1844 = vadd.f32 %v1424, %v1812
    %v1845 = vadd.f32 %v1425, %v1813
    %v1846 = vadd.f32 %v1426, %v1814
    %v1847 = vadd.f32 %v1427, %v1815
    %v1848 = vadd.f32 %v1428, %v1816
    %v1849 = vadd.f32 %v1429, %v1817
    %v1850 = vadd.f32 %v1430, %v1818
    %v1851 = vadd.f32 %v1431, %v1819
    %v1852 = vadd.f32 %v1432, %v1820
    %v1853 = vadd.f32 %v1433, %v1821
    %v1854 = vadd.f32 %v1434, %v1822
    %v1855 = vadd.f32 %v1435, %v1823
    %v1856 = vadd.f32 %v1436, %v1824
    %v1857 = vadd.f32 %v1437, %v1825
    %v1858 = vadd.f32 %v1438, %v1826
    %v1859 = vadd.f32 %v1439, %v1827
    %v1860 = vadd.f32 %v1440, %v1828
    %v1861 = vadd.f32 %v1441, %v1829
    %v1862 = vadd.f32 %v1442, %v1830
    %v1863 = vadd.f32 %v1443, %v1831
    %v1864 = vadd.f32 %v1444, %v1832
    %v1865 = vadd.f32 %v1445, %v1833
    %v1866 = vadd.f32 %v1446, %v1834
    %1867 = vst [vmem:[#allocation4] sm:$0xff] %v1835
    %1868 = vst [vmem:[#allocation4 + $0x8] sm:$0xff] %v1836
    %1869 = vst [vmem:[#allocation4 + $0x10] sm:$0xff] %v1837
    %1870 = vst [vmem:[#allocation4 + $0x18] sm:$0xff] %v1838
    %1871 = vst [vmem:[#allocation4 + $0x20] sm:$0xff] %v1839
    %1872 = vst [vmem:[#allocation4 + $0x28] sm:$0xff] %v1840
    %1873 = vst [vmem:[#allocation4 + $0x30] sm:$0xff] %v1841
    %1874 = vst [vmem:[#allocation4 + $0x38] sm:$0xff] %v1842
    %1875 = vst [vmem:[#allocation4 + $0x40] sm:$0xff] %v1843
    %1876 = vst [vmem:[#allocation4 + $0x48] sm:$0xff] %v1844
    %1877 = vst [vmem:[#allocation4 + $0x50] sm:$0xff] %v1845
    %1878 = vst [vmem:[#allocation4 + $0x58] sm:$0xff] %v1846
    %1879 = vst [vmem:[#allocation4 + $0x60] sm:$0xff] %v1847
    %1880 = vst [vmem:[#allocation4 + $0x68] sm:$0xff] %v1848
    %1881 = vst [vmem:[#allocation4 + $0x70] sm:$0xff] %v1849
    %1882 = vst [vmem:[#allocation4 + $0x78] sm:$0xff] %v1850
    %1883 = vst [vmem:[#allocation4 + $0x80] sm:$0xff] %v1851
    %1884 = vst [vmem:[#allocation4 + $0x88] sm:$0xff] %v1852
    %1885 = vst [vmem:[#allocation4 + $0x90] sm:$0xff] %v1853
    %1886 = vst [vmem:[#allocation4 + $0x98] sm:$0xff] %v1854
    %1887 = vst [vmem:[#allocation4 + $0xa0] sm:$0xff] %v1855
    %1888 = vst [vmem:[#allocation4 + $0xa8] sm:$0xff] %v1856
    %1889 = vst [vmem:[#allocation4 + $0xb0] sm:$0xff] %v1857
    %1890 = vst [vmem:[#allocation4 + $0xb8] sm:$0xff] %v1858
    %1891 = vst [vmem:[#allocation4 + $0xc0] sm:$0xff] %v1859
    %1892 = vst [vmem:[#allocation4 + $0xc8] sm:$0xff] %v1860
    %1893 = vst [vmem:[#allocation4 + $0xd0] sm:$0xff] %v1861
    %1894 = vst [vmem:[#allocation4 + $0xd8] sm:$0xff] %v1862
    %1895 = vst [vmem:[#allocation4 + $0xe0] sm:$0xff] %v1863
    %1896 = vst [vmem:[#allocation4 + $0xe8] sm:$0xff] %v1864
    %1897 = vst [vmem:[#allocation4 + $0xf0] sm:$0xff] %v1865
    %1898 = vst [vmem:[#allocation4 + $0xf8] sm:$0xff] %v1866
    // Predicated region
    $region22: #{tpu_custom_call.1} parent=1 // pred_check
      _
    $region23: #{tpu_custom_call.1} parent=1 // pred_check_branch
      %1900 = sbr.rel (0) target = $region25
    $region24: #{tpu_custom_call.1} parent=1 // pred_region
      %1902 = vsyncadd [#allocation5], 0
      %s1903 = sshll.u32 [#allocation4], 4
      %s1904 = int_to_ptr.vmem [resolvable:$true] %s1903
      %s1905 = sshll.u32 %s5, 4
      %s1906 = int_to_ptr.hbm [resolvable:$true] %s1905
      %1911 = dma.vmem_to_hbm [thread:$0]  %s1904, 4096, %s1906, [#allocation5], 128, 128, 8
    $region25: #{tpu_custom_call.1} parent=1 // pred_fallthru
      _
    // Predicated region
    $region26: #{tpu_custom_call.1} parent=1 // pred_check
      _
    $region27: #{tpu_custom_call.1} parent=1 // pred_check_branch
      %1913 = sbr.rel (0) target = $region29
    $region28: #{tpu_custom_call.1} parent=1 // pred_region
      %1915 = dma.done [#allocation5], 4096
    $region29: #{tpu_custom_call.1} parent=1 // pred_fallthru
      _
    %1916 = vsyncpa [#allocation5], 1

</llo_original>
